<compile_context>
chip_gen: v7x
topology: tpu7x:2x2x1
jax: 0.10.0
libtpu: 0.0.40
codegen_flags: <defaults>
</compile_context>

<pallas_src>
import functools
import math

import numpy as np
import jax
import jax.numpy as jnp
from jax import lax
from jax.experimental import pallas as pl
from jax.experimental.pallas import tpu as pltpu

WINDOW_SIZE = 11
SIGMA = 1.5
PAD = WINDOW_SIZE // 2


def _gaussian_1d(window_size=WINDOW_SIZE, sigma=SIGMA):
    g = np.array(
        [math.exp(-((x - window_size // 2) ** 2) / (2.0 * sigma ** 2))
         for x in range(window_size)],
        dtype=np.float64)
    g = g / g.sum()
    return g.astype(np.float32)


_G1D = _gaussian_1d()
_G2D = np.outer(_G1D, _G1D).astype(np.float32)


def _banded_conv_matrix(n):
    """(n, n) banded matrix B with B[j, i] = g[j - i + PAD]:  (x @ B)[i] equals
    the 1-D gaussian conv of x with zero padding PAD.  The zero padding is
    folded into the truncated border bands, so no host-side jnp.pad is needed."""
    m = np.zeros((n, n), dtype=np.float32)
    for j in range(n):
        for i in range(n):
            k = j - i + PAD
            if 0 <= k < WINDOW_SIZE:
                m[j, i] = _G1D[k]
    return m


# --------------------------------------------------------------------------
# Pallas kernel: per-scale, per-batch-element fused loss terms
# --------------------------------------------------------------------------
def _scale_loss_kernel(img1_ref, img2_ref, flow_ref, mx_ref, my_ref, out_ref,
                       *, H, W, C, Cf, weight):
    i1 = img1_ref[0].astype(jnp.float32)      # (C, H, W) image
    i2 = img2_ref[0].astype(jnp.float32)      # (C, H, W) reconstruction
    flow = flow_ref[0].astype(jnp.float32)    # (Cf, H, W)
    mx = mx_ref[...]                          # (W, W) banded gaussian (lane conv)
    my = my_ref[...]                          # (H, H) banded gaussian (sublane conv)

    # ---- charbonnier L1: ((d^2 + eps^2) ** 0.4), eps = 1e-4 -----------------
    d = i1 - i2
    l1_mean = jnp.mean(jnp.exp(0.4 * jnp.log(d * d + 1e-4 * 1e-4)))

    # ---- charbonnier smoothness of flow gradients, alpha=0.3, eps=1e-7 ------
    eps2 = 1e-7 * 1e-7
    gx = flow[:, :, :-1] - flow[:, :, 1:]                   # (Cf, H, W-1)
    gy = flow[:, :-1, :] - flow[:, 1:, :]                   # (Cf, H-1, W)
    # PyTorch zero-pads the gradient maps (last col / last row) before the
    # charbonnier; each padded element contributes charbonnier(0) = (eps^2)^0.3.
    ch0 = float(eps2 ** 0.3)
    smooth_sum = (jnp.sum(jnp.exp(0.3 * jnp.log(gx * gx + eps2)))
                  + jnp.sum(jnp.exp(0.3 * jnp.log(gy * gy + eps2)))
                  + float(Cf * (H + W)) * ch0)
    smooth_mean = smooth_sum / float(Cf * H * W) * weight

    # ---- SSIM: depthwise 11x11 gaussian conv (zero pad 5) on the MXU --------
    # Stack the 5 conv operands so each direction is a single big matmul.
    n = 5 * C
    ops = jnp.concatenate([i1, i2, i1 * i1, i2 * i2, i1 * i2], axis=0)  # (5C,H,W)
    # horizontal (lane) conv: (5C*H, W) @ (W, W)
    th = jnp.dot(ops.reshape(n * H, W), mx,
                 preferred_element_type=jnp.float32).reshape(n, H, W)
    # vertical (sublane) conv: batched matmul My @ th[k]
    conv = jnp.einsum('nij,njw->niw', jnp.broadcast_to(my, (n, H, H)), th,
                      preferred_element_type=jnp.float32)               # (5C,H,W)
    mu1, mu2 = conv[0:C], conv[C:2 * C]
    e11, e22, e12 = conv[2 * C:3 * C], conv[3 * C:4 * C], conv[4 * C:5 * C]
    mu1_sq = mu1 * mu1
    mu2_sq = mu2 * mu2
    mu1_mu2 = mu1 * mu2
    sigma1_sq = e11 - mu1_sq
    sigma2_sq = e22 - mu2_sq
    sigma12 = e12 - mu1_mu2
    C1 = 0.01 ** 2
    C2 = 0.03 ** 2
    num = (2.0 * mu1_mu2 + C1) * (2.0 * sigma12 + C2)
    den = (mu1_sq + mu2_sq + C1) * (sigma1_sq + sigma2_sq + C2)
    # SSIMLoss(size_average=False, denominator=1): mean(1 - ssim_map)
    ssim_mean = 1.0 - jnp.mean(num * pl.reciprocal(den, approx=True))

    # ---- flow sparsity term (used only if flow_sparsity=True) ---------------
    flow_l1 = jnp.mean(jnp.abs(flow))

    # ---- pack all 4 scalars into one (8,128) tile: sublane row r = metric r -
    row = lax.broadcasted_iota(jnp.int32, (8, 128), 0)
    tile = (jnp.where(row == 0, l1_mean, 0.0)
            + jnp.where(row == 1, smooth_mean, 0.0)
            + jnp.where(row == 2, ssim_mean, 0.0)
            + jnp.where(row == 3, flow_l1, 0.0))
    out_ref[0] = tile


def _scale_losses_pallas(img1, img2, flow, weight):
    B, C, H, W = img1.shape
    Cf = flow.shape[1]
    mx = jnp.asarray(_banded_conv_matrix(W))   # lane-direction banded gaussian
    my = jnp.asarray(_banded_conv_matrix(H))   # sublane-direction banded gaussian

    kernel = functools.partial(_scale_loss_kernel, H=H, W=W, C=C, Cf=Cf,
                               weight=float(weight))

    # TODO(synk): for very high-res inputs (v7x: 64 MiB VMEM) strip-tile over H
    # with a PAD halo, and fold several batch elements / multiscale levels into
    # one pallas_call to amortize per-step overhead at the tiny scales.
    out = pl.pallas_call(
        kernel,
        out_shape=jax.ShapeDtypeStruct((B, 8, 128), jnp.float32),
        grid_spec=pltpu.PrefetchScalarGridSpec(
            num_scalar_prefetch=0,
            grid=(B,),
            in_specs=[
                pl.BlockSpec((1, C, H, W), lambda b: (b, 0, 0, 0)),
                pl.BlockSpec((1, C, H, W), lambda b: (b, 0, 0, 0)),
                pl.BlockSpec((1, Cf, H, W), lambda b: (b, 0, 0, 0)),
                pl.BlockSpec((W, W), lambda b: (0, 0)),
                pl.BlockSpec((H, H), lambda b: (0, 0)),
            ],
            out_specs=pl.BlockSpec((1, 8, 128), lambda b: (b, 0, 0)),
        ),
        compiler_params=pltpu.CompilerParams(
            dimension_semantics=("parallel",),
            vmem_limit_bytes=48 * 1024 * 1024),
    )(img1, img2, flow, mx, my)

    # row 0: L1, row 1: weighted smoothness, row 2: SSIM loss, row 3: mean|flow|
    return out[:, 0, 0], out[:, 1, 0], out[:, 2, 0], out[:, 3, 0]


# --------------------------------------------------------------------------
# MotionNetLoss (JAX/Pallas)
# --------------------------------------------------------------------------
class MotionNetLossPallas:
    def __init__(self, regularization_criterion, is_multiscale=True,
                 smooth_weights=(0.01, 0.02, 0.04, 0.08, 0.16),
                 highres=False, calculate_ssim_full=False,
                 flow_sparsity=False, sparsity_weight=1.0,
                 smooth_weight_multiplier=1.0):
        self.smooth_weights = [w * smooth_weight_multiplier for w in smooth_weights]
        if highres:
            self.smooth_weights.insert(0, 0.005)
        self.is_multiscale = is_multiscale
        self.calculate_ssim_full = calculate_ssim_full
        self.flow_sparsity = flow_sparsity
        self.sparsity_weight = sparsity_weight
        self.regularization_criterion = regularization_criterion

    def __call__(self, originals, images, reconstructed, outputs, model_params):
        if outputs[0].shape[0] != images[0].shape[0]:
            raise ValueError('Image shape: ', images[0].shape,
                             'Flow shape:', outputs[0].shape)
        if self.is_multiscale:
            if len(images) == 1:
                weights = [self.smooth_weights[0]]
            elif len(images) <= len(self.smooth_weights):
                weights = self.smooth_weights[:len(images)]
            else:
                raise ValueError(
                    'Incorrect number of multiscale outputs: %d. Expected %d'
                    % (len(images), len(self.smooth_weights)))
        else:
            weights = [1.0]

        L1_mean, smooth_mean, SSIM_mean, flow_l1s = [], [], [], []
        for real, est, flow, w in zip(images, reconstructed, outputs, weights):
            l1_m, sm_m, ss_m, fl1_m = _scale_losses_pallas(real, est, flow, w)
            L1_mean.append(l1_m)
            smooth_mean.append(sm_m)
            SSIM_mean.append(ss_m)
            flow_l1s.append(fl1_m * self.sparsity_weight)

        SSIM_per_image = jnp.stack(SSIM_mean).sum(axis=0)
        L1_per_image = jnp.stack(L1_mean).sum(axis=0)
        smoothness_per_image = jnp.stack(smooth_mean).sum(axis=0)
        regularization_loss = self.regularization_criterion(model_params)

        # TODO(synk): calculate_ssim_full branch (F.interpolate bilinear upsample
        # + full-resolution SSIM) not implemented; default path returns NaN.
        SSIM_full_mean = jnp.array([jnp.nan], dtype=jnp.float32)

        loss_components = {
            'reg_loss': regularization_loss,
            'SSIM': SSIM_per_image,
            'L1': L1_per_image,
            'smoothness': smoothness_per_image,
            'SSIM_full': SSIM_full_mean,
        }
        loss = (jnp.mean(SSIM_per_image) + jnp.mean(L1_per_image)
                + jnp.mean(smoothness_per_image) + regularization_loss)
        if self.flow_sparsity:
            flow_sparsity = jnp.stack(flow_l1s).sum(axis=0)
            loss = loss + jnp.mean(flow_sparsity)
            loss_components['flow_sparsity'] = flow_sparsity
        return loss, loss_components


# --------------------------------------------------------------------------
# Pure-JAX reference (for verification only)
# --------------------------------------------------------------------------
def _reference_loss(images, reconstructed, outputs, model_params,
                    reg_criterion, weights):
    window2d = jnp.asarray(_G2D, jnp.float32)

    def charbonnier_ref(t, alpha, eps):
        return (t * t + eps * eps) ** alpha

    def dwconv_ref(x):
        C = x.shape[1]
        w = jnp.broadcast_to(window2d[None, None],
                             (C, 1, WINDOW_SIZE, WINDOW_SIZE))
        return lax.conv_general_dilated(
            x, w, (1, 1), ((PAD, PAD), (PAD, PAD)),
            dimension_numbers=('NCHW', 'OIHW', 'NCHW'),
            feature_group_count=C, precision=lax.Precision.HIGHEST)

    def ssim_loss_map(i1, i2):
        mu1, mu2 = dwconv_ref(i1), dwconv_ref(i2)
        mu1_sq, mu2_sq, mu1_mu2 = mu1 * mu1, mu2 * mu2, mu1 * mu2
        s1 = dwconv_ref(i1 * i1) - mu1_sq
        s2 = dwconv_ref(i2 * i2) - mu2_sq
        s12 = dwconv_ref(i1 * i2) - mu1_mu2
        C1, C2 = 0.01 ** 2, 0.03 ** 2
        ssim = ((2 * mu1_mu2 + C1) * (2 * s12 + C2)) / (
            (mu1_sq + mu2_sq + C1) * (s1 + s2 + C2))
        return 1.0 - ssim

    def grad_x(img):
        gx = img[:, :, :, :-1] - img[:, :, :, 1:]
        return jnp.pad(gx, ((0, 0), (0, 0), (0, 0), (0, 1)))

    def grad_y(img):
        gy = img[:, :, :-1, :] - img[:, :, 1:, :]
        return jnp.pad(gy, ((0, 0), (0, 0), (0, 1), (0, 0)))

    L1_mean = [jnp.mean(charbonnier_ref(r - e, 0.4, 1e-4), axis=(1, 2, 3))
               for r, e in zip(images, reconstructed)]
    smooth_mean = [jnp.mean(charbonnier_ref(grad_x(o), 0.3, 1e-7)
                            + charbonnier_ref(grad_y(o), 0.3, 1e-7),
                            axis=(1, 2, 3)) * w
                   for o, w in zip(outputs, weights)]
    SSIM_mean = [jnp.mean(ssim_loss_map(r, e), axis=(1, 2, 3))
                 for r, e in zip(images, reconstructed)]

    SSIM_per = jnp.stack(SSIM_mean).sum(axis=0)
    L1_per = jnp.stack(L1_mean).sum(axis=0)
    sm_per = jnp.stack(smooth_mean).sum(axis=0)
    reg = reg_criterion(model_params)
    loss = jnp.mean(SSIM_per) + jnp.mean(L1_per) + jnp.mean(sm_per) + reg
    return loss, {'SSIM': SSIM_per, 'L1': L1_per, 'smoothness': sm_per}


# --------------------------------------------------------------------------
if __name__ == "__main__":
    key = jax.random.PRNGKey(0)
    keys = iter(jax.random.split(key, 16))

    B, C = 2, 3
    scales = [(16, 16), (8, 8)]          # two multiscale levels

    images, recons, flows = [], [], []
    for (H, W) in scales:
        images.append(jax.random.uniform(next(keys), (B, C, H, W), jnp.float32))
        recons.append(jax.random.uniform(next(keys), (B, C, H, W), jnp.float32))
        flows.append(0.5 * jax.random.normal(next(keys), (B, 2, H, W), jnp.float32))
    originals = jax.random.uniform(next(keys), (B, 6, 32, 32), jnp.float32)

    # deterministic synthetic "model" parameters + simple L2 regularizer
    model_params = {
        'conv_w': 0.1 * jax.random.normal(next(keys), (4, 3, 3, 3), jnp.float32),
        'conv_b': jnp.zeros((4,), jnp.float32),
    }

    def reg_criterion(params):
        return 1e-4 * sum(jnp.sum(p.astype(jnp.float32) ** 2)
                          for p in jax.tree_util.tree_leaves(params))

    RTOL, ATOL = 3e-3, 1e-3

    loss_fn = MotionNetLossPallas(reg_criterion)
    loss, comps = loss_fn(originals, tuple(images), tuple(recons),
                          tuple(flows), model_params)
    loss = jax.block_until_ready(loss)

    # verify against pure-JAX reference
    weights = loss_fn.smooth_weights[:len(images)]
    ref_loss, ref_comps = _reference_loss(images, recons, flows, model_params,
                                          reg_criterion, weights)
    assert np.allclose(np.asarray(loss), np.asarray(ref_loss),
                       rtol=RTOL, atol=ATOL), (float(loss), float(ref_loss))
    for name in ('SSIM', 'L1', 'smoothness'):
        assert np.allclose(np.asarray(comps[name]), np.asarray(ref_comps[name]),
                           rtol=RTOL, atol=ATOL), name
    assert bool(jnp.all(jnp.isnan(comps['SSIM_full'])))

    # flow-sparsity path
    sw = 2.0
    loss_fn_fs = MotionNetLossPallas(reg_criterion, flow_sparsity=True,
                                     sparsity_weight=sw)
    loss_fs, comps_fs = loss_fn_fs(originals, tuple(images), tuple(recons),
                                   tuple(flows), model_params)
    loss_fs = jax.block_until_ready(loss_fs)
    ref_fs = sum(jnp.mean(jnp.abs(f), axis=(1, 2, 3)) for f in flows) * sw
    assert np.allclose(np.asarray(comps_fs['flow_sparsity']),
                       np.asarray(ref_fs), rtol=RTOL, atol=ATOL)
    assert np.allclose(np.asarray(loss_fs),
                       np.asarray(ref_loss + jnp.mean(ref_fs)),
                       rtol=RTOL, atol=ATOL)

    print("KERNEL_OK")
</pallas_src>

<mosaic_0001>
module attributes {stable_mosaic.version = 11 : i64} {
  func.func @_scale_loss_kernel(%arg0: i32, %arg1: memref<1x3x16x16xf32, #tpu.memory_space<vmem>>, %arg2: memref<1x3x16x16xf32, #tpu.memory_space<vmem>>, %arg3: memref<1x2x16x16xf32, #tpu.memory_space<vmem>>, %arg4: memref<16x16xf32, #tpu.memory_space<vmem>>, %arg5: memref<16x16xf32, #tpu.memory_space<vmem>>, %arg6: memref<1x8x128xf32, #tpu.memory_space<vmem>>) attributes {dimension_semantics = [#tpu.dimension_semantics<parallel>], iteration_bounds = array<i64: 2>, scalar_prefetch = 0 : i64, scratch_operands = 0 : i64, tpu.core_type = #tpu.core_type<tc>, window_params = [{transform_indices = @transform_0, window_bounds = array<i64: 1, 3, 16, 16>}, {transform_indices = @transform_1, window_bounds = array<i64: 1, 3, 16, 16>}, {transform_indices = @transform_2, window_bounds = array<i64: 1, 2, 16, 16>}, {pipeline_mode = #tpu.pipeline_mode<synchronous>, transform_indices = @transform_3, window_bounds = array<i64: 16, 16>}, {pipeline_mode = #tpu.pipeline_mode<synchronous>, transform_indices = @transform_4, window_bounds = array<i64: 16, 16>}, {transform_indices = @transform_5, window_bounds = array<i64: 1, 8, 128>}]} {
    %c0 = arith.constant 0 : index
    %c0_0 = arith.constant 0 : index
    %c0_1 = arith.constant 0 : index
    %c0_2 = arith.constant 0 : index
    %0 = vector.load %arg1[%c0, %c0_0, %c0_1, %c0_2] : memref<1x3x16x16xf32, #tpu.memory_space<vmem>>, vector<1x3x16x16xf32>
    %1 = vector.shape_cast %0 : vector<1x3x16x16xf32> to vector<3x16x16xf32>
    %c0_3 = arith.constant 0 : index
    %c0_4 = arith.constant 0 : index
    %c0_5 = arith.constant 0 : index
    %c0_6 = arith.constant 0 : index
    %2 = vector.load %arg2[%c0_3, %c0_4, %c0_5, %c0_6] : memref<1x3x16x16xf32, #tpu.memory_space<vmem>>, vector<1x3x16x16xf32>
    %3 = vector.shape_cast %2 : vector<1x3x16x16xf32> to vector<3x16x16xf32>
    %c0_7 = arith.constant 0 : index
    %c0_8 = arith.constant 0 : index
    %c0_9 = arith.constant 0 : index
    %c0_10 = arith.constant 0 : index
    %4 = vector.load %arg3[%c0_7, %c0_8, %c0_9, %c0_10] : memref<1x2x16x16xf32, #tpu.memory_space<vmem>>, vector<1x2x16x16xf32>
    %5 = vector.shape_cast %4 : vector<1x2x16x16xf32> to vector<2x16x16xf32>
    %c0_11 = arith.constant 0 : index
    %c0_12 = arith.constant 0 : index
    %6 = vector.load %arg4[%c0_11, %c0_12] : memref<16x16xf32, #tpu.memory_space<vmem>>, vector<16x16xf32>
    %c0_13 = arith.constant 0 : index
    %c0_14 = arith.constant 0 : index
    %7 = vector.load %arg5[%c0_13, %c0_14] : memref<16x16xf32, #tpu.memory_space<vmem>>, vector<16x16xf32>
    %8 = arith.subf %1, %3 : vector<3x16x16xf32>
    %9 = arith.mulf %8, %8 : vector<3x16x16xf32>
    %cst = arith.constant 9.99999993E-9 : f32
    %10 = vector.broadcast %cst : f32 to vector<3x16x16xf32>
    %11 = arith.addf %9, %10 : vector<3x16x16xf32>
    %12 = math.log %11 : vector<3x16x16xf32>
    %cst_15 = arith.constant 4.000000e-01 : f32
    %13 = vector.broadcast %cst_15 : f32 to vector<3x16x16xf32>
    %14 = arith.mulf %13, %12 : vector<3x16x16xf32>
    %15 = math.exp %14 : vector<3x16x16xf32>
    %16 = vector.shape_cast %15 : vector<3x16x16xf32> to vector<1x3x16x16xf32>
    %cst_16 = arith.constant dense<0.000000e+00> : vector<1xf32>
    %17 = vector.multi_reduction <add>, %16, %cst_16 [1, 2, 3] : vector<1x3x16x16xf32> to vector<1xf32>
    %18 = vector.shape_cast %17 : vector<1xf32> to vector<1x1x1x1xf32>
    %19 = vector.extract %18[0, 0, 0, 0] : f32 from vector<1x1x1x1xf32>
    %cst_17 = arith.constant 7.680000e+02 : f32
    %20 = arith.divf %19, %cst_17 : f32
    %21 = vector.extract_strided_slice %5 {offsets = [0, 0, 0], sizes = [2, 16, 15], strides = [1, 1, 1]} : vector<2x16x16xf32> to vector<2x16x15xf32>
    %22 = vector.extract_strided_slice %5 {offsets = [0, 0, 1], sizes = [2, 16, 15], strides = [1, 1, 1]} : vector<2x16x16xf32> to vector<2x16x15xf32>
    %23 = arith.subf %21, %22 : vector<2x16x15xf32>
    %24 = vector.extract_strided_slice %5 {offsets = [0, 0, 0], sizes = [2, 15, 16], strides = [1, 1, 1]} : vector<2x16x16xf32> to vector<2x15x16xf32>
    %25 = vector.extract_strided_slice %5 {offsets = [0, 1, 0], sizes = [2, 15, 16], strides = [1, 1, 1]} : vector<2x16x16xf32> to vector<2x15x16xf32>
    %26 = arith.subf %24, %25 : vector<2x15x16xf32>
    %27 = arith.mulf %23, %23 : vector<2x16x15xf32>
    %cst_18 = arith.constant 9.99999982E-15 : f32
    %28 = vector.broadcast %cst_18 : f32 to vector<2x16x15xf32>
    %29 = arith.addf %27, %28 : vector<2x16x15xf32>
    %30 = math.log %29 : vector<2x16x15xf32>
    %cst_19 = arith.constant 3.000000e-01 : f32
    %31 = vector.broadcast %cst_19 : f32 to vector<2x16x15xf32>
    %32 = arith.mulf %31, %30 : vector<2x16x15xf32>
    %33 = math.exp %32 : vector<2x16x15xf32>
    %34 = vector.shape_cast %33 : vector<2x16x15xf32> to vector<1x2x16x15xf32>
    %cst_20 = arith.constant dense<0.000000e+00> : vector<1xf32>
    %35 = vector.multi_reduction <add>, %34, %cst_20 [1, 2, 3] : vector<1x2x16x15xf32> to vector<1xf32>
    %36 = vector.shape_cast %35 : vector<1xf32> to vector<1x1x1x1xf32>
    %37 = vector.extract %36[0, 0, 0, 0] : f32 from vector<1x1x1x1xf32>
    %38 = arith.mulf %26, %26 : vector<2x15x16xf32>
    %cst_21 = arith.constant 9.99999982E-15 : f32
    %39 = vector.broadcast %cst_21 : f32 to vector<2x15x16xf32>
    %40 = arith.addf %38, %39 : vector<2x15x16xf32>
    %41 = math.log %40 : vector<2x15x16xf32>
    %cst_22 = arith.constant 3.000000e-01 : f32
    %42 = vector.broadcast %cst_22 : f32 to vector<2x15x16xf32>
    %43 = arith.mulf %42, %41 : vector<2x15x16xf32>
    %44 = math.exp %43 : vector<2x15x16xf32>
    %45 = vector.shape_cast %44 : vector<2x15x16xf32> to vector<1x2x15x16xf32>
    %cst_23 = arith.constant dense<0.000000e+00> : vector<1xf32>
    %46 = vector.multi_reduction <add>, %45, %cst_23 [1, 2, 3] : vector<1x2x15x16xf32> to vector<1xf32>
    %47 = vector.shape_cast %46 : vector<1xf32> to vector<1x1x1x1xf32>
    %48 = vector.extract %47[0, 0, 0, 0] : f32 from vector<1x1x1x1xf32>
    %49 = arith.addf %37, %48 : f32
    %cst_24 = arith.constant 0.00403812714 : f32
    %50 = arith.addf %49, %cst_24 : f32
    %cst_25 = arith.constant 5.120000e+02 : f32
    %51 = arith.divf %50, %cst_25 : f32
    %cst_26 = arith.constant 0.00999999977 : f32
    %52 = arith.mulf %51, %cst_26 : f32
    %53 = arith.mulf %1, %1 : vector<3x16x16xf32>
    %54 = arith.mulf %3, %3 : vector<3x16x16xf32>
    %55 = arith.mulf %1, %3 : vector<3x16x16xf32>
    %56 = tpu.concatenate %1, %3, %53, %54, %55 in 0 : vector<3x16x16xf32>, vector<3x16x16xf32>, vector<3x16x16xf32>, vector<3x16x16xf32>, vector<3x16x16xf32> -> vector<15x16x16xf32>
    %57 = vector.shape_cast %56 : vector<15x16x16xf32> to vector<240x16xf32>
    %cst_27 = arith.constant dense<0.000000e+00> : vector<240x16xf32>
    %58 = tpu.matmul %57, %6, %cst_27 {dimension_numbers = #tpu.dot_dimension_numbers<[1], [0], [0], [1], [0, 0, 1, 1], [], []>} : vector<240x16xf32>, vector<16x16xf32>, vector<240x16xf32> -> vector<240x16xf32>
    %59 = vector.shape_cast %58 : vector<240x16xf32> to vector<15x16x16xf32>
    %60 = vector.shape_cast %7 : vector<16x16xf32> to vector<1x16x16xf32>
    %61 = vector.broadcast %60 : vector<1x16x16xf32> to vector<15x16x16xf32>
    "tpu.trace_start"() <{level = 10 : i32, message = "nij,njw->niw"}> : () -> ()
    %cst_28 = arith.constant dense<0.000000e+00> : vector<15x16x16xf32>
    %62 = tpu.matmul %61, %59, %cst_28 {dimension_numbers = #tpu.dot_dimension_numbers<[2], [1], [1], [2], [0, 0, 0, 1, 1, 2], [0], [0]>} : vector<15x16x16xf32>, vector<15x16x16xf32>, vector<15x16x16xf32> -> vector<15x16x16xf32>
    "tpu.trace_stop"() : () -> ()
    %63 = vector.extract_strided_slice %62 {offsets = [0, 0, 0], sizes = [3, 16, 16], strides = [1, 1, 1]} : vector<15x16x16xf32> to vector<3x16x16xf32>
    %64 = vector.extract_strided_slice %62 {offsets = [3, 0, 0], sizes = [3, 16, 16], strides = [1, 1, 1]} : vector<15x16x16xf32> to vector<3x16x16xf32>
    %65 = vector.extract_strided_slice %62 {offsets = [6, 0, 0], sizes = [3, 16, 16], strides = [1, 1, 1]} : vector<15x16x16xf32> to vector<3x16x16xf32>
    %66 = vector.extract_strided_slice %62 {offsets = [9, 0, 0], sizes = [3, 16, 16], strides = [1, 1, 1]} : vector<15x16x16xf32> to vector<3x16x16xf32>
    %67 = vector.extract_strided_slice %62 {offsets = [12, 0, 0], sizes = [3, 16, 16], strides = [1, 1, 1]} : vector<15x16x16xf32> to vector<3x16x16xf32>
    %68 = arith.mulf %63, %63 : vector<3x16x16xf32>
    %69 = arith.mulf %64, %64 : vector<3x16x16xf32>
    %70 = arith.mulf %63, %64 : vector<3x16x16xf32>
    %71 = arith.subf %65, %68 : vector<3x16x16xf32>
    %72 = arith.subf %66, %69 : vector<3x16x16xf32>
    %73 = arith.subf %67, %70 : vector<3x16x16xf32>
    %cst_29 = arith.constant 2.000000e+00 : f32
    %74 = vector.broadcast %cst_29 : f32 to vector<3x16x16xf32>
    %75 = arith.mulf %74, %70 : vector<3x16x16xf32>
    %cst_30 = arith.constant 9.99999974E-5 : f32
    %76 = vector.broadcast %cst_30 : f32 to vector<3x16x16xf32>
    %77 = arith.addf %75, %76 : vector<3x16x16xf32>
    %cst_31 = arith.constant 2.000000e+00 : f32
    %78 = vector.broadcast %cst_31 : f32 to vector<3x16x16xf32>
    %79 = arith.mulf %78, %73 : vector<3x16x16xf32>
    %cst_32 = arith.constant 8.99999984E-4 : f32
    %80 = vector.broadcast %cst_32 : f32 to vector<3x16x16xf32>
    %81 = arith.addf %79, %80 : vector<3x16x16xf32>
    %82 = arith.mulf %77, %81 : vector<3x16x16xf32>
    %83 = arith.addf %68, %69 : vector<3x16x16xf32>
    %cst_33 = arith.constant 9.99999974E-5 : f32
    %84 = vector.broadcast %cst_33 : f32 to vector<3x16x16xf32>
    %85 = arith.addf %83, %84 : vector<3x16x16xf32>
    %86 = arith.addf %71, %72 : vector<3x16x16xf32>
    %cst_34 = arith.constant 8.99999984E-4 : f32
    %87 = vector.broadcast %cst_34 : f32 to vector<3x16x16xf32>
    %88 = arith.addf %86, %87 : vector<3x16x16xf32>
    %89 = arith.mulf %85, %88 : vector<3x16x16xf32>
    %90 = tpu.reciprocal %89 {approx = true} : vector<3x16x16xf32> -> vector<3x16x16xf32>
    %91 = arith.mulf %82, %90 : vector<3x16x16xf32>
    %92 = vector.shape_cast %91 : vector<3x16x16xf32> to vector<1x3x16x16xf32>
    %cst_35 = arith.constant dense<0.000000e+00> : vector<1xf32>
    %93 = vector.multi_reduction <add>, %92, %cst_35 [1, 2, 3] : vector<1x3x16x16xf32> to vector<1xf32>
    %94 = vector.shape_cast %93 : vector<1xf32> to vector<1x1x1x1xf32>
    %95 = vector.extract %94[0, 0, 0, 0] : f32 from vector<1x1x1x1xf32>
    %cst_36 = arith.constant 7.680000e+02 : f32
    %96 = arith.divf %95, %cst_36 : f32
    %cst_37 = arith.constant 1.000000e+00 : f32
    %97 = arith.subf %cst_37, %96 : f32
    %98 = math.absf %5 : vector<2x16x16xf32>
    %99 = vector.shape_cast %98 : vector<2x16x16xf32> to vector<1x2x16x16xf32>
    %cst_38 = arith.constant dense<0.000000e+00> : vector<1xf32>
    %100 = vector.multi_reduction <add>, %99, %cst_38 [1, 2, 3] : vector<1x2x16x16xf32> to vector<1xf32>
    %101 = vector.shape_cast %100 : vector<1xf32> to vector<1x1x1x1xf32>
    %102 = vector.extract %101[0, 0, 0, 0] : f32 from vector<1x1x1x1xf32>
    %cst_39 = arith.constant 5.120000e+02 : f32
    %103 = arith.divf %102, %cst_39 : f32
    %104 = tpu.iota {dimensions = array<i32: 0>} : vector<8x128xi32>
    %c0_i32 = arith.constant 0 : i32
    %105 = vector.broadcast %c0_i32 : i32 to vector<8x128xi32>
    %106 = arith.cmpi eq, %104, %105 : vector<8x128xi32>
    %cst_40 = arith.constant 0.000000e+00 : f32
    %107 = vector.broadcast %20 : f32 to vector<8x128xf32>
    %108 = vector.broadcast %cst_40 : f32 to vector<8x128xf32>
    %109 = arith.select %106, %107, %108 : vector<8x128xi1>, vector<8x128xf32>
    %c1_i32 = arith.constant 1 : i32
    %110 = vector.broadcast %c1_i32 : i32 to vector<8x128xi32>
    %111 = arith.cmpi eq, %104, %110 : vector<8x128xi32>
    %cst_41 = arith.constant 0.000000e+00 : f32
    %112 = vector.broadcast %52 : f32 to vector<8x128xf32>
    %113 = vector.broadcast %cst_41 : f32 to vector<8x128xf32>
    %114 = arith.select %111, %112, %113 : vector<8x128xi1>, vector<8x128xf32>
    %115 = arith.addf %109, %114 : vector<8x128xf32>
    %c2_i32 = arith.constant 2 : i32
    %116 = vector.broadcast %c2_i32 : i32 to vector<8x128xi32>
    %117 = arith.cmpi eq, %104, %116 : vector<8x128xi32>
    %cst_42 = arith.constant 0.000000e+00 : f32
    %118 = vector.broadcast %97 : f32 to vector<8x128xf32>
    %119 = vector.broadcast %cst_42 : f32 to vector<8x128xf32>
    %120 = arith.select %117, %118, %119 : vector<8x128xi1>, vector<8x128xf32>
    %121 = arith.addf %115, %120 : vector<8x128xf32>
    %c3_i32 = arith.constant 3 : i32
    %122 = vector.broadcast %c3_i32 : i32 to vector<8x128xi32>
    %123 = arith.cmpi eq, %104, %122 : vector<8x128xi32>
    %cst_43 = arith.constant 0.000000e+00 : f32
    %124 = vector.broadcast %103 : f32 to vector<8x128xf32>
    %125 = vector.broadcast %cst_43 : f32 to vector<8x128xf32>
    %126 = arith.select %123, %124, %125 : vector<8x128xi1>, vector<8x128xf32>
    %127 = arith.addf %121, %126 : vector<8x128xf32>
    %c0_44 = arith.constant 0 : index
    %c0_45 = arith.constant 0 : index
    %c0_46 = arith.constant 0 : index
    %128 = vector.load %arg6[%c0_44, %c0_45, %c0_46] : memref<1x8x128xf32, #tpu.memory_space<vmem>>, vector<1x8x128xf32>
    %129 = vector.shape_cast %128 : vector<1x8x128xf32> to vector<8x128xf32>
    %130 = vector.shape_cast %127 : vector<8x128xf32> to vector<1x8x128xf32>
    tpu.vector_store %arg6[%c0_44, %c0_45, %c0_46], %130 {strides = array<i32>} : memref<1x8x128xf32, #tpu.memory_space<vmem>>, vector<1x8x128xf32>,
    return
  }
  func.func @transform_0(%arg0: i32) -> (i32, i32, i32, i32) {
    %c0_i32 = arith.constant 0 : i32
    %c0_i32_0 = arith.constant 0 : i32
    %c0_i32_1 = arith.constant 0 : i32
    %c0_i32_2 = arith.constant 0 : i32
    return %arg0, %c0_i32, %c0_i32_0, %c0_i32_1 : i32, i32, i32, i32
  }
  func.func @transform_1(%arg0: i32) -> (i32, i32, i32, i32) {
    %c0_i32 = arith.constant 0 : i32
    %c0_i32_0 = arith.constant 0 : i32
    %c0_i32_1 = arith.constant 0 : i32
    %c0_i32_2 = arith.constant 0 : i32
    return %arg0, %c0_i32, %c0_i32_0, %c0_i32_1 : i32, i32, i32, i32
  }
  func.func @transform_2(%arg0: i32) -> (i32, i32, i32, i32) {
    %c0_i32 = arith.constant 0 : i32
    %c0_i32_0 = arith.constant 0 : i32
    %c0_i32_1 = arith.constant 0 : i32
    %c0_i32_2 = arith.constant 0 : i32
    return %arg0, %c0_i32, %c0_i32_0, %c0_i32_1 : i32, i32, i32, i32
  }
  func.func @transform_3(%arg0: i32) -> (i32, i32) {
    %c0_i32 = arith.constant 0 : i32
    %c0_i32_0 = arith.constant 0 : i32
    %c0_i32_1 = arith.constant 0 : i32
    return %c0_i32, %c0_i32_0 : i32, i32
  }
  func.func @transform_4(%arg0: i32) -> (i32, i32) {
    %c0_i32 = arith.constant 0 : i32
    %c0_i32_0 = arith.constant 0 : i32
    %c0_i32_1 = arith.constant 0 : i32
    return %c0_i32, %c0_i32_0 : i32, i32
  }
  func.func @transform_5(%arg0: i32) -> (i32, i32, i32) {
    %c0_i32 = arith.constant 0 : i32
    %c0_i32_0 = arith.constant 0 : i32
    %c0_i32_1 = arith.constant 0 : i32
    return %arg0, %c0_i32, %c0_i32_0 : i32, i32, i32
  }
}

</mosaic_0001>

<llo_original>
// kernel: tpu_custom_call.1
$region0: #{tpu_custom_call.1}
  #allocation0 [shape = 'u32[]', space=smem, size = 0x4, offset = 0x4, fixed_abs, tag = 'smem constant byte address 0x4 - core index']
  #allocation1 [shape = 'u32[144,128]{1,0:T(1,128)}', space=vmem, size = 0x12000, scoped, tag = 'internal scratch']
  %s0 = inlined_call_operand.hbm [shape: f32[2,3,16,16], index: 0, kind: input, shape index: {}]
  %s1 = inlined_call_operand.hbm [shape: f32[2,3,16,16], index: 1, kind: input, shape index: {}]
  %s2 = inlined_call_operand.hbm [shape: f32[2,2,16,16], index: 2, kind: input, shape index: {}]
  %s3 = inlined_call_operand.hbm [shape: f32[16,16], index: 3, kind: input, shape index: {}]
  %s4 = inlined_call_operand.hbm [shape: f32[16,16], index: 4, kind: input, shape index: {}]
  %s5 = inlined_call_operand.hbm [shape: f32[2,8,128], index: 5, kind: output, shape index: {}]
  %s6 = sld [smem:[#allocation0]]
  $region73: #{tpu_custom_call.1} parent=0
    _
  %s8 = ssub.s32 1, %s6
  %s9 = scalar_select 0, %s8, %s6
  $region1: #{tpu_custom_call.1} parent=0
    #allocation2 [shape = 'u8[49152]{0}', space=vmem, size = 0xc000, scoped, tag = 'input window, operand 0']
    #allocation3 [shape = 's32[2]{0}', space=sflag, size = 0x8, scoped, tag = 'scoped memory for tpu_custom_call.1']
    #allocation4 [shape = 's32[2]{0}', space=sflag, size = 0x8, scoped, tag = 'scoped memory for tpu_custom_call.1']
    #allocation5 [shape = 'u8[49152]{0}', space=vmem, size = 0xc000, scoped, tag = 'input window, operand 1']
    #allocation6 [shape = 's32[2]{0}', space=sflag, size = 0x8, scoped, tag = 'scoped memory for tpu_custom_call.1']
    #allocation7 [shape = 'u8[32768]{0}', space=vmem, size = 0x8000, scoped, tag = 'input window, operand 2']
    #allocation8 [shape = 'u8[8192]{0}', space=vmem, size = 0x2000, scoped, tag = 'input window, operand 3, single buffered']
    #allocation9 [shape = 's32[1]{0}', space=sflag, size = 0x4, scoped, tag = 'scoped memory for tpu_custom_call.1']
    #allocation10 [shape = 'u8[8192]{0}', space=vmem, size = 0x2000, scoped, tag = 'input window, operand 4, single buffered']
    #allocation11 [shape = 'u8[8192]{0}', space=vmem, size = 0x2000, scoped, tag = 'output window, operand 0']
    %10 = vsyncpa [#allocation3], 0
    %s11 = scalar_lea.sflag [#allocation3], 1
    %12 = vsyncpa %s11, 0
    %13 = vsyncpa [#allocation6], 0
    %s14 = scalar_lea.sflag [#allocation6], 1
    %15 = vsyncpa %s14, 0
    %16 = vsyncpa [#allocation9], 0
    %17 = vsyncpa [#allocation4], 0
    %s18 = scalar_lea.sflag [#allocation4], 1
    %19 = vsyncpa %s18, 0
    loop: start=0, step=1, limit=4
    $region2: #{tpu_custom_call.1} parent=1 // loop_pre_header
      _
    $region3: #{tpu_custom_call.1} parent=1 // loop_header
      %s21 = sphi 0, %s25
      %p22 = scmp.ge.s32.totalorder %s21, 4
      %s31 = sphi 0, %s33
      %s34 = sphi 0, %s31
      %s35 = sphi 0, %s34
      %s51 = sphi 0, %s35
      %s57 = sphi 0, %s59
      %s60 = sphi 0, %s57
      %s61 = sphi 0, %s60
      %s77 = sphi 0, %s61
      %s83 = sphi 0, %s85
      %s86 = sphi 0, %s83
      %s87 = sphi 0, %s86
      %s103 = sphi 0, %s87
      %s107 = sphi 0, %s107
      %s109 = sphi 0, %s107
      %s110 = sphi 0, %s109
      %s124 = sphi 0, %s110
      %s128 = sphi 0, %s128
      %s130 = sphi 0, %s128
      %s131 = sphi 0, %s130
      %s145 = sphi 0, %s131
      %s151 = sphi 0, %s153
      %s154 = sphi 0, %s151
      %s155 = sphi 0, %s154
      %s171 = sphi 0, %s155
    $region4: #{tpu_custom_call.1} parent=1 // loop_header_branch
      %24 = sbr.rel (%p22) target = $region8
    $region5: #{tpu_custom_call.1} parent=1 // loop_body
      %s26 = ssub.s32 %s21, 1
      %s27 = ssub.s32 %s21, 2
      %s28 = sadd.s32 %s21, 1
      %s29 = ssub.s32 %s21, %s28
      %p30 = scmp.eq.s32.totalorder %s29, 0
      %s32 = sadd.s32 %s31, 1
      %s33 = scalar_select %p30, %s31, %s32
      %p36 = pneg %p30
      %p37 = scmp.eq.s32.totalorder %s21, 1
      %p38 = por %p36, %p37
      %p39 = scmp.ne.s32.totalorder %s31, %s34
      %p40 = scmp.eq.s32.totalorder %s21, 0
      %p41 = por %p39, %p40
      %p42 = scmp.ne.s32.totalorder %s31, %s34
      %p43 = scmp.eq.s32.totalorder %s26, 1
      %p44 = por %p42, %p43
      %p45 = scmp.ne.s32.totalorder %s34, %s35
      %p46 = scmp.eq.s32.totalorder %s26, 0
      %p47 = por %p45, %p46
      %p48 = scmp.ne.s32.totalorder %s34, %s35
      %p49 = scmp.eq.s32.totalorder %s27, 1
      %p50 = por %p48, %p49
      %p52 = scmp.ne.s32.totalorder %s35, %s51
      %p53 = scmp.eq.s32.totalorder %s27, 0
      %p54 = por %p52, %p53
      %s55 = ssub.s32 %s21, %s28
      %p56 = scmp.eq.s32.totalorder %s55, 0
      %s58 = sadd.s32 %s57, 1
      %s59 = scalar_select %p56, %s57, %s58
      %p62 = pneg %p56
      %p63 = scmp.eq.s32.totalorder %s21, 1
      %p64 = por %p62, %p63
      %p65 = scmp.ne.s32.totalorder %s57, %s60
      %p66 = scmp.eq.s32.totalorder %s21, 0
      %p67 = por %p65, %p66
      %p68 = scmp.ne.s32.totalorder %s57, %s60
      %p69 = scmp.eq.s32.totalorder %s26, 1
      %p70 = por %p68, %p69
      %p71 = scmp.ne.s32.totalorder %s60, %s61
      %p72 = scmp.eq.s32.totalorder %s26, 0
      %p73 = por %p71, %p72
      %p74 = scmp.ne.s32.totalorder %s60, %s61
      %p75 = scmp.eq.s32.totalorder %s27, 1
      %p76 = por %p74, %p75
      %p78 = scmp.ne.s32.totalorder %s61, %s77
      %p79 = scmp.eq.s32.totalorder %s27, 0
      %p80 = por %p78, %p79
      %s81 = ssub.s32 %s21, %s28
      %p82 = scmp.eq.s32.totalorder %s81, 0
      %s84 = sadd.s32 %s83, 1
      %s85 = scalar_select %p82, %s83, %s84
      %p88 = pneg %p82
      %p89 = scmp.eq.s32.totalorder %s21, 1
      %p90 = por %p88, %p89
      %p91 = scmp.ne.s32.totalorder %s83, %s86
      %p92 = scmp.eq.s32.totalorder %s21, 0
      %p93 = por %p91, %p92
      %p94 = scmp.ne.s32.totalorder %s83, %s86
      %p95 = scmp.eq.s32.totalorder %s26, 1
      %p96 = por %p94, %p95
      %p97 = scmp.ne.s32.totalorder %s86, %s87
      %p98 = scmp.eq.s32.totalorder %s26, 0
      %p99 = por %p97, %p98
      %p100 = scmp.ne.s32.totalorder %s86, %s87
      %p101 = scmp.eq.s32.totalorder %s27, 1
      %p102 = por %p100, %p101
      %p104 = scmp.ne.s32.totalorder %s87, %s103
      %p105 = scmp.eq.s32.totalorder %s27, 0
      %p106 = por %p104, %p105
      %s108 = sadd.s32 %s107, 1
      %p111 = scmp.eq.s32.totalorder %s21, 1
      %p112 = scmp.ne.s32.totalorder %s107, %s109
      %p113 = scmp.eq.s32.totalorder %s21, 0
      %p114 = por %p112, %p113
      %p115 = scmp.ne.s32.totalorder %s107, %s109
      %p116 = scmp.eq.s32.totalorder %s26, 1
      %p117 = por %p115, %p116
      %p118 = scmp.ne.s32.totalorder %s109, %s110
      %p119 = scmp.eq.s32.totalorder %s26, 0
      %p120 = por %p118, %p119
      %p121 = scmp.ne.s32.totalorder %s109, %s110
      %p122 = scmp.eq.s32.totalorder %s27, 1
      %p123 = por %p121, %p122
      %p125 = scmp.ne.s32.totalorder %s110, %s124
      %p126 = scmp.eq.s32.totalorder %s27, 0
      %p127 = por %p125, %p126
      %s129 = sadd.s32 %s128, 1
      %p132 = scmp.eq.s32.totalorder %s21, 1
      %p133 = scmp.ne.s32.totalorder %s128, %s130
      %p134 = scmp.eq.s32.totalorder %s21, 0
      %p135 = por %p133, %p134
      %p136 = scmp.ne.s32.totalorder %s128, %s130
      %p137 = scmp.eq.s32.totalorder %s26, 1
      %p138 = por %p136, %p137
      %p139 = scmp.ne.s32.totalorder %s130, %s131
      %p140 = scmp.eq.s32.totalorder %s26, 0
      %p141 = por %p139, %p140
      %p142 = scmp.ne.s32.totalorder %s130, %s131
      %p143 = scmp.eq.s32.totalorder %s27, 1
      %p144 = por %p142, %p143
      %p146 = scmp.ne.s32.totalorder %s131, %s145
      %p147 = scmp.eq.s32.totalorder %s27, 0
      %p148 = por %p146, %p147
      %s149 = ssub.s32 %s21, %s28
      %p150 = scmp.eq.s32.totalorder %s149, 0
      %s152 = sadd.s32 %s151, 1
      %s153 = scalar_select %p150, %s151, %s152
      %p156 = pneg %p150
      %p157 = scmp.eq.s32.totalorder %s21, 1
      %p158 = por %p156, %p157
      %p159 = scmp.ne.s32.totalorder %s151, %s154
      %p160 = scmp.eq.s32.totalorder %s21, 0
      %p161 = por %p159, %p160
      %p162 = scmp.ne.s32.totalorder %s151, %s154
      %p163 = scmp.eq.s32.totalorder %s26, 1
      %p164 = por %p162, %p163
      %p165 = scmp.ne.s32.totalorder %s154, %s155
      %p166 = scmp.eq.s32.totalorder %s26, 0
      %p167 = por %p165, %p166
      %p168 = scmp.ne.s32.totalorder %s154, %s155
      %p169 = scmp.eq.s32.totalorder %s27, 1
      %p170 = por %p168, %p169
      %p172 = scmp.ne.s32.totalorder %s155, %s171
      %p173 = scmp.eq.s32.totalorder %s27, 0
      %p174 = por %p172, %p173
      %p175 = scmp.le.s32.totalorder 1, %s21
      %p176 = scmp.lt.s32.totalorder %s21, 3
      %p177 = pnand %p175, %p176
      %p178 = pneg %p177
      // Predicated region
      $region9: #{tpu_custom_call.1} parent=5 // pred_check
        _
      $region10: #{tpu_custom_call.1} parent=5 // pred_check_branch
        %180 = sbr.rel (%p177) target = $region12
      $region11: #{tpu_custom_call.1} parent=5 // pred_region
        %s181 = ssub.s32 %s21, 1
        // Predicated region
        $region13: #{tpu_custom_call.1} parent=11 // pred_check
          %p182 = pneg %p120
        $region14: #{tpu_custom_call.1} parent=11 // pred_check_branch
          %184 = sbr.rel (%p182) target = $region16
        $region15: #{tpu_custom_call.1} parent=11 // pred_region
          %s186 = ssub.s32 256, 256
          %187 = vsyncadd [#allocation9], %s186
          %s188 = sshll.u32 [#allocation8], 4
          %s189 = int_to_ptr.vmem [resolvable:$true] %s188
          %194 = dma.hbm_to_vmem [thread:$0]  %s3, 256, %s189, [#allocation9], 128, 128, 8
        $region16: #{tpu_custom_call.1} parent=11 // pred_fallthru
          _
        // Predicated region
        $region17: #{tpu_custom_call.1} parent=11 // pred_check
          %p195 = pneg %p141
        $region18: #{tpu_custom_call.1} parent=11 // pred_check_branch
          %197 = sbr.rel (%p195) target = $region20
        $region19: #{tpu_custom_call.1} parent=11 // pred_region
          %s199 = ssub.s32 256, 256
          %200 = vsyncadd [#allocation9], %s199
          %s201 = sshll.u32 [#allocation10], 4
          %s202 = int_to_ptr.vmem [resolvable:$true] %s201
          %207 = dma.hbm_to_vmem [thread:$0]  %s4, 256, %s202, [#allocation9], 128, 128, 8
        $region20: #{tpu_custom_call.1} parent=11 // pred_fallthru
          _
      $region12: #{tpu_custom_call.1} parent=5 // pred_fallthru
        _
      %p208 = scmp.lt.s32.totalorder %s21, 2
      // Predicated region
      $region21: #{tpu_custom_call.1} parent=5 // pred_check
        %p209 = pneg %p208
      $region22: #{tpu_custom_call.1} parent=5 // pred_check_branch
        %211 = sbr.rel (%p209) target = $region24
      $region23: #{tpu_custom_call.1} parent=5 // pred_region
        // Predicated region
        $region25: #{tpu_custom_call.1} parent=23 // pred_check
          %p212 = pneg %p41
        $region26: #{tpu_custom_call.1} parent=23 // pred_check_branch
          %214 = sbr.rel (%p212) target = $region28
        $region27: #{tpu_custom_call.1} parent=23 // pred_region
          %s215 = sand.u32 %s31, 1
          %s216 = scalar_lea.sflag [#allocation3], %s215
          %s217 = sand.u32 %s31, 1
          %s218 = smul.addr %s217, 48
          %s219 = scalar_lea.vmem [#allocation2], %s218
          %s221 = ssub.s32 768, 768
          %222 = vsyncadd %s216, %s221
          %s223 = smul.addr %s21, 6
          %s224 = smul.addr %s223, 128
          %s225 = scalar_lea.hbm %s0, %s224
          %s226 = sshll.u32 %s219, 4
          %s227 = int_to_ptr.vmem [resolvable:$true] %s226
          %232 = dma.hbm_to_vmem [thread:$0]  %s225, 768, %s227, %s216, 128, 128, 8
        $region28: #{tpu_custom_call.1} parent=23 // pred_fallthru
          _
        // Predicated region
        $region29: #{tpu_custom_call.1} parent=23 // pred_check
          %p233 = pneg %p67
        $region30: #{tpu_custom_call.1} parent=23 // pred_check_branch
          %235 = sbr.rel (%p233) target = $region32
        $region31: #{tpu_custom_call.1} parent=23 // pred_region
          %s236 = sand.u32 %s21, 1
          %s237 = scalar_lea.sflag [#allocation6], %s236
          %s238 = sand.u32 %s57, 1
          %s239 = smul.addr %s238, 48
          %s240 = scalar_lea.vmem [#allocation5], %s239
          %s242 = ssub.s32 768, 768
          %243 = vsyncadd %s237, %s242
          %s244 = smul.addr %s21, 6
          %s245 = smul.addr %s244, 128
          %s246 = scalar_lea.hbm %s1, %s245
          %s247 = sshll.u32 %s240, 4
          %s248 = int_to_ptr.vmem [resolvable:$true] %s247
          %253 = dma.hbm_to_vmem [thread:$0]  %s246, 768, %s248, %s237, 128, 128, 8
        $region32: #{tpu_custom_call.1} parent=23 // pred_fallthru
          _
        // Predicated region
        $region33: #{tpu_custom_call.1} parent=23 // pred_check
          %p254 = pneg %p93
        $region34: #{tpu_custom_call.1} parent=23 // pred_check_branch
          %256 = sbr.rel (%p254) target = $region36
        $region35: #{tpu_custom_call.1} parent=23 // pred_region
          %s257 = sand.u32 %s21, 1
          %s258 = scalar_lea.sflag [#allocation6], %s257
          %s259 = sand.u32 %s83, 1
          %s260 = smul.addr %s259, 32
          %s261 = scalar_lea.vmem [#allocation7], %s260
          %s263 = ssub.s32 512, 512
          %264 = vsyncadd %s258, %s263
          %s265 = smul.addr %s21, 4
          %s266 = smul.addr %s265, 128
          %s267 = scalar_lea.hbm %s2, %s266
          %s268 = sshll.u32 %s261, 4
          %s269 = int_to_ptr.vmem [resolvable:$true] %s268
          %274 = dma.hbm_to_vmem [thread:$0]  %s267, 512, %s269, %s258, 128, 128, 8
        $region36: #{tpu_custom_call.1} parent=23 // pred_fallthru
          _
      $region24: #{tpu_custom_call.1} parent=5 // pred_fallthru
        _
      %p275 = scmp.le.s32.totalorder 1, %s21
      %p276 = scmp.lt.s32.totalorder %s21, 3
      %p277 = pnand %p275, %p276
      %p278 = pneg %p277
      // Predicated region
      $region37: #{tpu_custom_call.1} parent=5 // pred_check
        _
      $region38: #{tpu_custom_call.1} parent=5 // pred_check_branch
        %280 = sbr.rel (%p277) target = $region40
      $region39: #{tpu_custom_call.1} parent=5 // pred_region
        %s281 = ssub.s32 %s21, 1
        %s282 = sand.u32 %s34, 1
        %s283 = scalar_lea.sflag [#allocation3], %s282
        %s284 = sand.u32 %s34, 1
        %s285 = smul.addr %s284, 48
        %s286 = scalar_lea.vmem [#allocation2], %s285
        // Predicated region
        $region41: #{tpu_custom_call.1} parent=39 // pred_check
          %p287 = pneg %p47
        $region42: #{tpu_custom_call.1} parent=39 // pred_check_branch
          %289 = sbr.rel (%p287) target = $region44
        $region43: #{tpu_custom_call.1} parent=39 // pred_region
          %290 = dma.done %s283, 768
        $region44: #{tpu_custom_call.1} parent=39 // pred_fallthru
          _
        %s291 = sand.u32 %s26, 1
        %s292 = scalar_lea.sflag [#allocation6], %s291
        %s293 = sand.u32 %s60, 1
        %s294 = smul.addr %s293, 48
        %s295 = scalar_lea.vmem [#allocation5], %s294
        // Predicated region
        $region45: #{tpu_custom_call.1} parent=39 // pred_check
          %p296 = pneg %p73
        $region46: #{tpu_custom_call.1} parent=39 // pred_check_branch
          %298 = sbr.rel (%p296) target = $region48
        $region47: #{tpu_custom_call.1} parent=39 // pred_region
          %299 = dma.done %s292, 768
        $region48: #{tpu_custom_call.1} parent=39 // pred_fallthru
          _
        %s300 = sand.u32 %s26, 1
        %s301 = scalar_lea.sflag [#allocation6], %s300
        %s302 = sand.u32 %s86, 1
        %s303 = smul.addr %s302, 32
        %s304 = scalar_lea.vmem [#allocation7], %s303
        // Predicated region
        $region49: #{tpu_custom_call.1} parent=39 // pred_check
          %p305 = pneg %p99
        $region50: #{tpu_custom_call.1} parent=39 // pred_check_branch
          %307 = sbr.rel (%p305) target = $region52
        $region51: #{tpu_custom_call.1} parent=39 // pred_region
          %308 = dma.done %s301, 512
        $region52: #{tpu_custom_call.1} parent=39 // pred_fallthru
          _
        // Predicated region
        $region53: #{tpu_custom_call.1} parent=39 // pred_check
          %p309 = pneg %p120
        $region54: #{tpu_custom_call.1} parent=39 // pred_check_branch
          %311 = sbr.rel (%p309) target = $region56
        $region55: #{tpu_custom_call.1} parent=39 // pred_region
          %312 = dma.done [#allocation9], 256
        $region56: #{tpu_custom_call.1} parent=39 // pred_fallthru
          _
        // Predicated region
        $region57: #{tpu_custom_call.1} parent=39 // pred_check
          %p313 = pneg %p141
        $region58: #{tpu_custom_call.1} parent=39 // pred_check_branch
          %315 = sbr.rel (%p313) target = $region60
        $region59: #{tpu_custom_call.1} parent=39 // pred_region
          %316 = dma.done [#allocation9], 256
        $region60: #{tpu_custom_call.1} parent=39 // pred_fallthru
          _
        %s317 = sand.u32 %s34, 1
        %s318 = scalar_lea.sflag [#allocation3], %s317
        %s319 = sand.u32 %s34, 1
        %s320 = smul.addr %s319, 48
        %s321 = scalar_lea.vmem [#allocation2], %s320
        %p322 = pneg %p47
        %p323 = pneg %p44
        %s324 = sand.u32 %s26, 1
        %s325 = scalar_lea.sflag [#allocation6], %s324
        %s326 = sand.u32 %s60, 1
        %s327 = smul.addr %s326, 48
        %s328 = scalar_lea.vmem [#allocation5], %s327
        %p329 = pneg %p73
        %p330 = pneg %p70
        %s331 = sand.u32 %s26, 1
        %s332 = scalar_lea.sflag [#allocation6], %s331
        %s333 = sand.u32 %s86, 1
        %s334 = smul.addr %s333, 32
        %s335 = scalar_lea.vmem [#allocation7], %s334
        %p336 = pneg %p99
        %p337 = pneg %p96
        %p338 = pneg %p120
        %p339 = pneg %p117
        %p340 = pneg %p141
        %p341 = pneg %p138
        %p342 = pneg %p167
        %p343 = pneg %p164
        %s344 = sand.u32 %s154, 1
        %s345 = scalar_lea.sflag [#allocation4], %s344
        %s346 = sand.u32 %s154, 1
        %s347 = smul.addr %s346, 8
        %s348 = scalar_lea.vmem [#allocation11], %s347
        %v349 = vld [vmem:[%s286] sm:$0xff]
        %v350 = vld [vmem:[%s286 + $0x8] sm:$0xff]
        %v351 = vld [vmem:[%s286 + $0x10] sm:$0xff]
        %v352 = vld [vmem:[%s286 + $0x18] sm:$0xff]
        %v353 = vld [vmem:[%s286 + $0x20] sm:$0xff]
        %v354 = vld [vmem:[%s286 + $0x28] sm:$0xff]
        %v355 = vld [vmem:[%s295] sm:$0xff]
        %v356 = vld [vmem:[%s295 + $0x8] sm:$0xff]
        %v357 = vld [vmem:[%s295 + $0x10] sm:$0xff]
        %v358 = vld [vmem:[%s295 + $0x18] sm:$0xff]
        %v359 = vld [vmem:[%s295 + $0x20] sm:$0xff]
        %v360 = vld [vmem:[%s295 + $0x28] sm:$0xff]
        %v361 = vld [vmem:[%s304] sm:$0xff]
        %v362 = vld [vmem:[%s304 + $0x8] sm:$0xff]
        %v363 = vld [vmem:[%s304 + $0x10] sm:$0xff]
        %v364 = vld [vmem:[%s304 + $0x18] sm:$0xff]
        %v365 = vld [vmem:[#allocation8] sm:$0xff]
        %v366 = vld [vmem:[#allocation8 + $0x8] sm:$0xff]
        %v367 = vld [vmem:[#allocation10] sm:$0xff]
        %v368 = vld [vmem:[#allocation10 + $0x8] sm:$0xff]
        %v369 = vsub.f32 %v349, %v355
        %v370 = vsub.f32 %v350, %v356
        %v371 = vsub.f32 %v351, %v357
        %v372 = vsub.f32 %v352, %v358
        %v373 = vsub.f32 %v353, %v359
        %v374 = vsub.f32 %v354, %v360
        %v375 = vmul.f32 %v369, %v369
        %v376 = vmul.f32 %v370, %v370
        %v377 = vmul.f32 %v371, %v371
        %v378 = vmul.f32 %v372, %v372
        %v379 = vmul.f32 %v373, %v373
        %v380 = vmul.f32 %v374, %v374
        %v381 = vadd.f32 %v375, 1e-08
        %v382 = vadd.f32 %v376, 1e-08
        %v383 = vadd.f32 %v377, 1e-08
        %v384 = vadd.f32 %v378, 1e-08
        %v385 = vadd.f32 %v379, 1e-08
        %v386 = vadd.f32 %v380, 1e-08
        %v387 = vlog2.pop %v381
        %v388 = vmul.f32 %v387, 0.6931472
        %v389 = vlog2.pop %v382
        %v390 = vmul.f32 %v389, 0.6931472
        %v391 = vlog2.pop %v383
        %v392 = vmul.f32 %v391, 0.6931472
        %v393 = vlog2.pop %v384
        %v394 = vmul.f32 %v393, 0.6931472
        %v395 = vlog2.pop %v385
        %v396 = vmul.f32 %v395, 0.6931472
        %v397 = vlog2.pop %v386
        %v398 = vmul.f32 %v397, 0.6931472
        %v399 = vmul.f32 %v388, 0.4
        %v400 = vmul.f32 %v390, 0.4
        %v401 = vmul.f32 %v392, 0.4
        %v402 = vmul.f32 %v394, 0.4
        %v403 = vmul.f32 %v396, 0.4
        %v404 = vmul.f32 %v398, 0.4
        %v405 = vmul.f32 %v399, 1.442695
        %v406 = vpow.pop %v405
        %v407 = vmul.f32 %v400, 1.442695
        %v408 = vpow.pop %v407
        %v409 = vmul.f32 %v401, 1.442695
        %v410 = vpow.pop %v409
        %v411 = vmul.f32 %v402, 1.442695
        %v412 = vpow.pop %v411
        %v413 = vmul.f32 %v403, 1.442695
        %v414 = vpow.pop %v413
        %v415 = vmul.f32 %v404, 1.442695
        %v416 = vpow.pop %v415
        %vm417 = vcmask 130048
        %v418 = vsel %vm417, %v406, 0.0
        %v419 = vsel %vm417, %v408, 0.0
        %v420 = vadd.f32 %v418, %v419
        %v421 = vsel %vm417, %v410, 0.0
        %v422 = vadd.f32 %v420, %v421
        %v423 = vsel %vm417, %v412, 0.0
        %v424 = vadd.f32 %v422, %v423
        %v425 = vsel %vm417, %v414, 0.0
        %v426 = vadd.f32 %v424, %v425
        %v427 = vsel %vm417, %v416, 0.0
        %v428 = vadd.f32 %v426, %v427
        %429 = vadd.xlane.f32.xlu0 %v428
        %v430 = vpop.xlane.xlu0 %429
        %v431 = vrot.slane %v430, 4
        %v432 = vadd.f32 %v430, %v431
        %v433 = vrot.slane %v432, 2
        %v434 = vadd.f32 %v432, %v433
        %v435 = vrot.slane %v434, 1
        %v436 = vadd.f32 %v434, %v435
        %s437 = vtos %v436
        %v438 = vrcp.pop 768.0
        %s439 = vtos %v438
        %s440 = smul.f32 %s437, %s439
        %445 = vrot.lane.b32.xlu0 %v361, 127
        %v446 = vpop.permute.xlu0 %445
        %447 = vrot.lane.b32.xlu0 %v362, 127
        %v448 = vpop.permute.xlu0 %447
        %449 = vrot.lane.b32.xlu0 %v363, 127
        %v450 = vpop.permute.xlu0 %449
        %451 = vrot.lane.b32.xlu0 %v364, 127
        %v452 = vpop.permute.xlu0 %451
        %v457 = vsub.f32 %v361, %v446
        %v458 = vsub.f32 %v362, %v448
        %v459 = vsub.f32 %v363, %v450
        %v460 = vsub.f32 %v364, %v452
        %vm461 = vcmask 1046528
        %v462 = vrot.slane %v361, 1
        %v463 = vrot.slane %v362, 1
        %v464 = vsel %vm461, %v462, %v463
        %v465 = vrot.slane %v363, 1
        %v466 = vrot.slane %v364, 1
        %v467 = vsel %vm461, %v465, %v466
        %v472 = vsub.f32 %v361, %v464
        %v473 = vsub.f32 %v362, %v463
        %v474 = vsub.f32 %v363, %v467
        %v475 = vsub.f32 %v364, %v466
        %v476 = vmul.f32 %v457, %v457
        %v477 = vmul.f32 %v458, %v458
        %v478 = vmul.f32 %v459, %v459
        %v479 = vmul.f32 %v460, %v460
        %v480 = vadd.f32 %v476, 1e-14
        %v481 = vadd.f32 %v477, 1e-14
        %v482 = vadd.f32 %v478, 1e-14
        %v483 = vadd.f32 %v479, 1e-14
        %v484 = vlog2.pop %v480
        %v485 = vmul.f32 %v484, 0.6931472
        %v486 = vlog2.pop %v481
        %v487 = vmul.f32 %v486, 0.6931472
        %v488 = vlog2.pop %v482
        %v489 = vmul.f32 %v488, 0.6931472
        %v490 = vlog2.pop %v483
        %v491 = vmul.f32 %v490, 0.6931472
        %v492 = vmul.f32 %v485, 0.3
        %v493 = vmul.f32 %v487, 0.3
        %v494 = vmul.f32 %v489, 0.3
        %v495 = vmul.f32 %v491, 0.3
        %v496 = vmul.f32 %v492, 1.442695
        %v497 = vpow.pop %v496
        %v498 = vmul.f32 %v493, 1.442695
        %v499 = vpow.pop %v498
        %v500 = vmul.f32 %v494, 1.442695
        %v501 = vpow.pop %v500
        %v502 = vmul.f32 %v495, 1.442695
        %v503 = vpow.pop %v502
        %vm504 = vcmask 121856
        %v505 = vsel %vm504, %v497, 0.0
        %v506 = vsel %vm504, %v499, 0.0
        %v507 = vadd.f32 %v505, %v506
        %v508 = vsel %vm504, %v501, 0.0
        %v509 = vadd.f32 %v507, %v508
        %v510 = vsel %vm504, %v503, 0.0
        %v511 = vadd.f32 %v509, %v510
        %512 = vadd.xlane.f32.xlu0 %v511
        %v513 = vpop.xlane.xlu0 %512
        %v514 = vrot.slane %v513, 4
        %v515 = vadd.f32 %v513, %v514
        %v516 = vrot.slane %v515, 2
        %v517 = vadd.f32 %v515, %v516
        %v518 = vrot.slane %v517, 1
        %v519 = vadd.f32 %v517, %v518
        %s520 = vtos %v519
        %v521 = vmul.f32 %v472, %v472
        %v522 = vmul.f32 %v473, %v473
        %v523 = vmul.f32 %v474, %v474
        %v524 = vmul.f32 %v475, %v475
        %v525 = vadd.f32 %v521, 1e-14
        %v526 = vadd.f32 %v522, 1e-14
        %v527 = vadd.f32 %v523, 1e-14
        %v528 = vadd.f32 %v524, 1e-14
        %v529 = vlog2.pop %v525
        %v530 = vmul.f32 %v529, 0.6931472
        %v531 = vlog2.pop %v526
        %v532 = vmul.f32 %v531, 0.6931472
        %v533 = vlog2.pop %v527
        %v534 = vmul.f32 %v533, 0.6931472
        %v535 = vlog2.pop %v528
        %v536 = vmul.f32 %v535, 0.6931472
        %v537 = vmul.f32 %v530, 0.3
        %v538 = vmul.f32 %v532, 0.3
        %v539 = vmul.f32 %v534, 0.3
        %v540 = vmul.f32 %v536, 0.3
        %v541 = vmul.f32 %v537, 1.442695
        %v542 = vpow.pop %v541
        %v543 = vmul.f32 %v538, 1.442695
        %v544 = vpow.pop %v543
        %v545 = vmul.f32 %v539, 1.442695
        %v546 = vpow.pop %v545
        %v547 = vmul.f32 %v540, 1.442695
        %v548 = vpow.pop %v547
        %v549 = vsel %vm417, %v542, 0.0
        %vm550 = vcmask 129024
        %v551 = vsel %vm550, %v544, 0.0
        %v552 = vadd.f32 %v549, %v551
        %v553 = vsel %vm417, %v546, 0.0
        %v554 = vadd.f32 %v552, %v553
        %v555 = vsel %vm550, %v548, 0.0
        %v556 = vadd.f32 %v554, %v555
        %557 = vadd.xlane.f32.xlu0 %v556
        %v558 = vpop.xlane.xlu0 %557
        %v559 = vrot.slane %v558, 4
        %v560 = vadd.f32 %v558, %v559
        %v561 = vrot.slane %v560, 2
        %v562 = vadd.f32 %v560, %v561
        %v563 = vrot.slane %v562, 1
        %v564 = vadd.f32 %v562, %v563
        %s565 = vtos %v564
        %s566 = sadd.f32 %s520, %s565
        %s567 = sadd.f32 %s566, 0.004038127
        %v568 = vrcp.pop 512.0
        %s569 = vtos %v568
        %s570 = smul.f32 %s567, %s569
        %s571 = smul.f32 %s570, 0.01
        %v572 = vmul.f32 %v349, %v349
        %v573 = vmul.f32 %v350, %v350
        %v574 = vmul.f32 %v351, %v351
        %v575 = vmul.f32 %v352, %v352
        %v576 = vmul.f32 %v353, %v353
        %v577 = vmul.f32 %v354, %v354
        %v578 = vmul.f32 %v355, %v355
        %v579 = vmul.f32 %v356, %v356
        %v580 = vmul.f32 %v357, %v357
        %v581 = vmul.f32 %v358, %v358
        %v582 = vmul.f32 %v359, %v359
        %v583 = vmul.f32 %v360, %v360
        %v584 = vmul.f32 %v349, %v355
        %v585 = vmul.f32 %v350, %v356
        %v586 = vmul.f32 %v351, %v357
        %v587 = vmul.f32 %v352, %v358
        %v588 = vmul.f32 %v353, %v359
        %v589 = vmul.f32 %v354, %v360
        %v591 = vsel %vm417, %v349, 0
        %v594 = vsel %vm417, %v350, 0
        %v597 = vsel %vm417, %v351, 0
        %v600 = vsel %vm417, %v352, 0
        %v603 = vsel %vm417, %v353, 0
        %v606 = vsel %vm417, %v354, 0
        %v609 = vsel %vm417, %v355, 0
        %v612 = vsel %vm417, %v356, 0
        %v615 = vsel %vm417, %v357, 0
        %v618 = vsel %vm417, %v358, 0
        %v621 = vsel %vm417, %v359, 0
        %v624 = vsel %vm417, %v360, 0
        %v627 = vsel %vm417, %v572, 0
        %v630 = vsel %vm417, %v573, 0
        %v633 = vsel %vm417, %v574, 0
        %v636 = vsel %vm417, %v575, 0
        %v639 = vsel %vm417, %v576, 0
        %v642 = vsel %vm417, %v577, 0
        %v645 = vsel %vm417, %v578, 0
        %v648 = vsel %vm417, %v579, 0
        %v651 = vsel %vm417, %v580, 0
        %v654 = vsel %vm417, %v581, 0
        %v657 = vsel %vm417, %v582, 0
        %v660 = vsel %vm417, %v583, 0
        %v663 = vsel %vm417, %v584, 0
        %v666 = vsel %vm417, %v585, 0
        %v669 = vsel %vm417, %v586, 0
        %v672 = vsel %vm417, %v587, 0
        %v675 = vsel %vm417, %v588, 0
        %v678 = vsel %vm417, %v589, 0
        %680 = vmatprep.subr.mxu0 0.0
        %681 = vmatpush1.msra.mxu0 %v365
        %682 = vmatprep.subr.mxu0 0.0
        %683 = vmatpush1.msra.mxu0 %v366
        %684 = vmatprep.subr.mxu0 0.0
        %685 = vmatpush1.msra.mxu0 0.0
        %686 = vmatprep.subr.mxu0 0.0
        %687 = vmatpush1.msra.mxu0 0.0
        %688 = vmatprep.subr.mxu0 0.0
        %689 = vmatpush1.msra.mxu0 0.0
        %690 = vmatprep.subr.mxu0 0.0
        %691 = vmatpush1.msra.mxu0 0.0
        %692 = vmatprep.subr.mxu0 0.0
        %693 = vmatpush1.msra.mxu0 0.0
        %694 = vmatprep.subr.mxu0 0.0
        %695 = vmatpush1.msra.mxu0 0.0
        %696 = vmatprep.subr.mxu0 0.0
        %697 = vmatpush1.msra.mxu0 0.0
        %698 = vmatprep.subr.mxu0 0.0
        %699 = vmatpush1.msra.mxu0 0.0
        %700 = vmatprep.subr.mxu0 0.0
        %701 = vmatpush1.msra.mxu0 0.0
        %702 = vmatprep.subr.mxu0 0.0
        %703 = vmatpush1.msra.mxu0 0.0
        %704 = vmatprep.subr.mxu0 0.0
        %705 = vmatpush1.msra.mxu0 0.0
        %706 = vmatprep.subr.mxu0 0.0
        %707 = vmatpush1.msra.mxu0 0.0
        %708 = vmatprep.subr.mxu0 0.0
        %709 = vmatpush1.msra.mxu0 0.0
        %710 = vmatprep.subr.mxu0 0.0
        %711 = vmatpush1.msra.mxu0 0.0
        %712 = vmatprep.subr.mxu0 0.0
        %713 = vmatpush1.msra.mxu0 0.0
        %714 = vmatprep.subr.mxu0 0.0
        %715 = vmatpush1.msra.mxu0 0.0
        %716 = vmatprep.subr.mxu0 0.0
        %717 = vmatpush1.msra.mxu0 0.0
        %718 = vmatprep.subr.mxu0 0.0
        %719 = vmatpush1.msra.mxu0 0.0
        %720 = vmatprep.subr.mxu0 0.0
        %721 = vmatpush1.msra.mxu0 0.0
        %722 = vmatprep.subr.mxu0 0.0
        %723 = vmatpush1.msra.mxu0 0.0
        %724 = vmatprep.subr.mxu0 0.0
        %725 = vmatpush1.msra.mxu0 0.0
        %726 = vmatprep.subr.mxu0 0.0
        %727 = vmatpush1.msra.mxu0 0.0
        %728 = vmatprep.subr.mxu0 0.0
        %729 = vmatpush1.msra.mxu0 0.0
        %730 = vmatprep.subr.mxu0 0.0
        %731 = vmatpush1.msra.mxu0 0.0
        %732 = vmatprep.subr.mxu0 0.0
        %733 = vmatpush1.msra.mxu0 0.0
        %734 = vmatprep.subr.mxu0 0.0
        %735 = vmatpush1.msra.mxu0 0.0
        %736 = vmatprep.subr.mxu0 0.0
        %737 = vmatpush1.msra.mxu0 0.0
        %738 = vmatprep.subr.mxu0 0.0
        %739 = vmatpush1.msra.mxu0 0.0
        %740 = vmatprep.subr.mxu0 0.0
        %741 = vmatpush1.msra.mxu0 0.0
        %742 = vmatprep.subr.mxu0 0.0
        %743 = vmatpush1.msra.mxu0 0.0
        %744 = vmatprep.mubr.f32.mxu0 0.0
        %745 = vmatmul.mubr.f32.gmra.mrb[0].mxu0 %v591
        %v746 = vpop.f32.mrb[0].mxu0
        %v747 = vadd.f32 0.0, %v746
        %v748 = vpop.f32.mrb[0].mxu0
        %749 = vmatprep.mubr.f32.mxu0 0.0
        %750 = vmatmul.mubr.f32.gmra.mrb[0].mxu0 %v594
        %v751 = vpop.f32.mrb[0].mxu0
        %v752 = vadd.f32 0.0, %v751
        %v753 = vpop.f32.mrb[0].mxu0
        %754 = vmatprep.mubr.f32.mxu0 0.0
        %755 = vmatmul.mubr.f32.gmra.mrb[0].mxu0 %v597
        %v756 = vpop.f32.mrb[0].mxu0
        %v757 = vadd.f32 0.0, %v756
        %v758 = vpop.f32.mrb[0].mxu0
        %759 = vmatprep.mubr.f32.mxu0 0.0
        %760 = vmatmul.mubr.f32.gmra.mrb[0].mxu0 %v600
        %v761 = vpop.f32.mrb[0].mxu0
        %v762 = vadd.f32 0.0, %v761
        %v763 = vpop.f32.mrb[0].mxu0
        %764 = vmatprep.mubr.f32.mxu0 0.0
        %765 = vmatmul.mubr.f32.gmra.mrb[0].mxu0 %v603
        %v766 = vpop.f32.mrb[0].mxu0
        %v767 = vadd.f32 0.0, %v766
        %v768 = vpop.f32.mrb[0].mxu0
        %769 = vmatprep.mubr.f32.mxu0 0.0
        %770 = vmatmul.mubr.f32.gmra.mrb[0].mxu0 %v606
        %v771 = vpop.f32.mrb[0].mxu0
        %v772 = vadd.f32 0.0, %v771
        %v773 = vpop.f32.mrb[0].mxu0
        %774 = vmatprep.mubr.f32.mxu0 0.0
        %775 = vmatmul.mubr.f32.gmra.mrb[0].mxu0 %v609
        %v776 = vpop.f32.mrb[0].mxu0
        %v777 = vadd.f32 0.0, %v776
        %v778 = vpop.f32.mrb[0].mxu0
        %779 = vmatprep.mubr.f32.mxu0 0.0
        %780 = vmatmul.mubr.f32.gmra.mrb[0].mxu0 %v612
        %v781 = vpop.f32.mrb[0].mxu0
        %v782 = vadd.f32 0.0, %v781
        %v783 = vpop.f32.mrb[0].mxu0
        %784 = vmatprep.mubr.f32.mxu0 0.0
        %785 = vmatmul.mubr.f32.gmra.mrb[0].mxu0 %v615
        %v786 = vpop.f32.mrb[0].mxu0
        %v787 = vadd.f32 0.0, %v786
        %v788 = vpop.f32.mrb[0].mxu0
        %789 = vmatprep.mubr.f32.mxu0 0.0
        %790 = vmatmul.mubr.f32.gmra.mrb[0].mxu0 %v618
        %v791 = vpop.f32.mrb[0].mxu0
        %v792 = vadd.f32 0.0, %v791
        %v793 = vpop.f32.mrb[0].mxu0
        %794 = vmatprep.mubr.f32.mxu0 0.0
        %795 = vmatmul.mubr.f32.gmra.mrb[0].mxu0 %v621
        %v796 = vpop.f32.mrb[0].mxu0
        %v797 = vadd.f32 0.0, %v796
        %v798 = vpop.f32.mrb[0].mxu0
        %799 = vmatprep.mubr.f32.mxu0 0.0
        %800 = vmatmul.mubr.f32.gmra.mrb[0].mxu0 %v624
        %v801 = vpop.f32.mrb[0].mxu0
        %v802 = vadd.f32 0.0, %v801
        %v803 = vpop.f32.mrb[0].mxu0
        %804 = vmatprep.mubr.f32.mxu0 0.0
        %805 = vmatmul.mubr.f32.gmra.mrb[0].mxu0 %v627
        %v806 = vpop.f32.mrb[0].mxu0
        %v807 = vadd.f32 0.0, %v806
        %v808 = vpop.f32.mrb[0].mxu0
        %809 = vmatprep.mubr.f32.mxu0 0.0
        %810 = vmatmul.mubr.f32.gmra.mrb[0].mxu0 %v630
        %v811 = vpop.f32.mrb[0].mxu0
        %v812 = vadd.f32 0.0, %v811
        %v813 = vpop.f32.mrb[0].mxu0
        %814 = vmatprep.mubr.f32.mxu0 0.0
        %815 = vmatmul.mubr.f32.gmra.mrb[0].mxu0 %v633
        %v816 = vpop.f32.mrb[0].mxu0
        %v817 = vadd.f32 0.0, %v816
        %v818 = vpop.f32.mrb[0].mxu0
        %819 = vmatprep.mubr.f32.mxu0 0.0
        %820 = vmatmul.mubr.f32.gmra.mrb[0].mxu0 %v636
        %v821 = vpop.f32.mrb[0].mxu0
        %v822 = vadd.f32 0.0, %v821
        %v823 = vpop.f32.mrb[0].mxu0
        %824 = vmatprep.mubr.f32.mxu0 0.0
        %825 = vmatmul.mubr.f32.gmra.mrb[0].mxu0 %v639
        %v826 = vpop.f32.mrb[0].mxu0
        %v827 = vadd.f32 0.0, %v826
        %v828 = vpop.f32.mrb[0].mxu0
        %829 = vmatprep.mubr.f32.mxu0 0.0
        %830 = vmatmul.mubr.f32.gmra.mrb[0].mxu0 %v642
        %v831 = vpop.f32.mrb[0].mxu0
        %v832 = vadd.f32 0.0, %v831
        %v833 = vpop.f32.mrb[0].mxu0
        %834 = vmatprep.mubr.f32.mxu0 0.0
        %835 = vmatmul.mubr.f32.gmra.mrb[0].mxu0 %v645
        %v836 = vpop.f32.mrb[0].mxu0
        %v837 = vadd.f32 0.0, %v836
        %v838 = vpop.f32.mrb[0].mxu0
        %839 = vmatprep.mubr.f32.mxu0 0.0
        %840 = vmatmul.mubr.f32.gmra.mrb[0].mxu0 %v648
        %v841 = vpop.f32.mrb[0].mxu0
        %v842 = vadd.f32 0.0, %v841
        %v843 = vpop.f32.mrb[0].mxu0
        %844 = vmatprep.mubr.f32.mxu0 0.0
        %845 = vmatmul.mubr.f32.gmra.mrb[0].mxu0 %v651
        %v846 = vpop.f32.mrb[0].mxu0
        %v847 = vadd.f32 0.0, %v846
        %v848 = vpop.f32.mrb[0].mxu0
        %849 = vmatprep.mubr.f32.mxu0 0.0
        %850 = vmatmul.mubr.f32.gmra.mrb[0].mxu0 %v654
        %v851 = vpop.f32.mrb[0].mxu0
        %v852 = vadd.f32 0.0, %v851
        %v853 = vpop.f32.mrb[0].mxu0
        %854 = vmatprep.mubr.f32.mxu0 0.0
        %855 = vmatmul.mubr.f32.gmra.mrb[0].mxu0 %v657
        %v856 = vpop.f32.mrb[0].mxu0
        %v857 = vadd.f32 0.0, %v856
        %v858 = vpop.f32.mrb[0].mxu0
        %859 = vmatprep.mubr.f32.mxu0 0.0
        %860 = vmatmul.mubr.f32.gmra.mrb[0].mxu0 %v660
        %v861 = vpop.f32.mrb[0].mxu0
        %v862 = vadd.f32 0.0, %v861
        %v863 = vpop.f32.mrb[0].mxu0
        %864 = vmatprep.mubr.f32.mxu0 0.0
        %865 = vmatmul.mubr.f32.gmra.mrb[0].mxu0 %v663
        %v866 = vpop.f32.mrb[0].mxu0
        %v867 = vadd.f32 0.0, %v866
        %v868 = vpop.f32.mrb[0].mxu0
        %869 = vmatprep.mubr.f32.mxu0 0.0
        %870 = vmatmul.mubr.f32.gmra.mrb[0].mxu0 %v666
        %v871 = vpop.f32.mrb[0].mxu0
        %v872 = vadd.f32 0.0, %v871
        %v873 = vpop.f32.mrb[0].mxu0
        %874 = vmatprep.mubr.f32.mxu0 0.0
        %875 = vmatmul.mubr.f32.gmra.mrb[0].mxu0 %v669
        %v876 = vpop.f32.mrb[0].mxu0
        %v877 = vadd.f32 0.0, %v876
        %v878 = vpop.f32.mrb[0].mxu0
        %879 = vmatprep.mubr.f32.mxu0 0.0
        %880 = vmatmul.mubr.f32.gmra.mrb[0].mxu0 %v672
        %v881 = vpop.f32.mrb[0].mxu0
        %v882 = vadd.f32 0.0, %v881
        %v883 = vpop.f32.mrb[0].mxu0
        %884 = vmatprep.mubr.f32.mxu0 0.0
        %885 = vmatmul.mubr.f32.gmra.mrb[0].mxu0 %v675
        %v886 = vpop.f32.mrb[0].mxu0
        %v887 = vadd.f32 0.0, %v886
        %v888 = vpop.f32.mrb[0].mxu0
        %889 = vmatprep.mubr.f32.mxu0 0.0
        %890 = vmatmul.mubr.f32.gmra.mrb[0].mxu0 %v678
        %v891 = vpop.f32.mrb[0].mxu0
        %v892 = vadd.f32 0.0, %v891
        %v893 = vpop.f32.mrb[0].mxu0
        %894 = vdwg.mxu0
        %v896 = vsel %vm417, %v367, 0
        %v899 = vsel %vm417, %v368, 0
        %901 = vmatprep.subr.mxu0 0.0
        %902 = vmatpush1.msra.mxu0 %v747
        %903 = vmatprep.subr.mxu0 0.0
        %904 = vmatpush1.msra.mxu0 %v752
        %905 = vmatprep.subr.mxu0 0.0
        %906 = vmatpush1.msra.mxu0 0.0
        %907 = vmatprep.subr.mxu0 0.0
        %908 = vmatpush1.msra.mxu0 0.0
        %909 = vmatprep.subr.mxu0 0.0
        %910 = vmatpush1.msra.mxu0 0.0
        %911 = vmatprep.subr.mxu0 0.0
        %912 = vmatpush1.msra.mxu0 0.0
        %913 = vmatprep.subr.mxu0 0.0
        %914 = vmatpush1.msra.mxu0 0.0
        %915 = vmatprep.subr.mxu0 0.0
        %916 = vmatpush1.msra.mxu0 0.0
        %917 = vmatprep.subr.mxu0 0.0
        %918 = vmatpush1.msra.mxu0 0.0
        %919 = vmatprep.subr.mxu0 0.0
        %920 = vmatpush1.msra.mxu0 0.0
        %921 = vmatprep.subr.mxu0 0.0
        %922 = vmatpush1.msra.mxu0 0.0
        %923 = vmatprep.subr.mxu0 0.0
        %924 = vmatpush1.msra.mxu0 0.0
        %925 = vmatprep.subr.mxu0 0.0
        %926 = vmatpush1.msra.mxu0 0.0
        %927 = vmatprep.subr.mxu0 0.0
        %928 = vmatpush1.msra.mxu0 0.0
        %929 = vmatprep.subr.mxu0 0.0
        %930 = vmatpush1.msra.mxu0 0.0
        %931 = vmatprep.subr.mxu0 0.0
        %932 = vmatpush1.msra.mxu0 0.0
        %933 = vmatprep.subr.mxu0 0.0
        %934 = vmatpush1.msra.mxu0 0.0
        %935 = vmatprep.subr.mxu0 0.0
        %936 = vmatpush1.msra.mxu0 0.0
        %937 = vmatprep.subr.mxu0 0.0
        %938 = vmatpush1.msra.mxu0 0.0
        %939 = vmatprep.subr.mxu0 0.0
        %940 = vmatpush1.msra.mxu0 0.0
        %941 = vmatprep.subr.mxu0 0.0
        %942 = vmatpush1.msra.mxu0 0.0
        %943 = vmatprep.subr.mxu0 0.0
        %944 = vmatpush1.msra.mxu0 0.0
        %945 = vmatprep.subr.mxu0 0.0
        %946 = vmatpush1.msra.mxu0 0.0
        %947 = vmatprep.subr.mxu0 0.0
        %948 = vmatpush1.msra.mxu0 0.0
        %949 = vmatprep.subr.mxu0 0.0
        %950 = vmatpush1.msra.mxu0 0.0
        %951 = vmatprep.subr.mxu0 0.0
        %952 = vmatpush1.msra.mxu0 0.0
        %953 = vmatprep.subr.mxu0 0.0
        %954 = vmatpush1.msra.mxu0 0.0
        %955 = vmatprep.subr.mxu0 0.0
        %956 = vmatpush1.msra.mxu0 0.0
        %957 = vmatprep.subr.mxu0 0.0
        %958 = vmatpush1.msra.mxu0 0.0
        %959 = vmatprep.subr.mxu0 0.0
        %960 = vmatpush1.msra.mxu0 0.0
        %961 = vmatprep.subr.mxu0 0.0
        %962 = vmatpush1.msra.mxu0 0.0
        %963 = vmatprep.subr.mxu0 0.0
        %964 = vmatpush1.msra.mxu0 0.0
        %965 = vmatprep.mubr.f32.mxu0 0.0
        %966 = vmatmul.mubr.f32.gmra.mrb[0].mxu0 %v896
        %v967 = vpop.f32.mrb[0].mxu0
        %v968 = vadd.f32 0.0, %v967
        %v969 = vpop.f32.mrb[0].mxu0
        %970 = vmatprep.mubr.f32.mxu0 0.0
        %971 = vmatmul.mubr.f32.gmra.mrb[0].mxu0 %v899
        %v972 = vpop.f32.mrb[0].mxu0
        %v973 = vadd.f32 0.0, %v972
        %v974 = vpop.f32.mrb[0].mxu0
        %975 = vdwg.mxu0
        %976 = vmatprep.subr.mxu0 0.0
        %977 = vmatpush1.msra.mxu0 %v757
        %978 = vmatprep.subr.mxu0 0.0
        %979 = vmatpush1.msra.mxu0 %v762
        %980 = vmatprep.subr.mxu0 0.0
        %981 = vmatpush1.msra.mxu0 0.0
        %982 = vmatprep.subr.mxu0 0.0
        %983 = vmatpush1.msra.mxu0 0.0
        %984 = vmatprep.subr.mxu0 0.0
        %985 = vmatpush1.msra.mxu0 0.0
        %986 = vmatprep.subr.mxu0 0.0
        %987 = vmatpush1.msra.mxu0 0.0
        %988 = vmatprep.subr.mxu0 0.0
        %989 = vmatpush1.msra.mxu0 0.0
        %990 = vmatprep.subr.mxu0 0.0
        %991 = vmatpush1.msra.mxu0 0.0
        %992 = vmatprep.subr.mxu0 0.0
        %993 = vmatpush1.msra.mxu0 0.0
        %994 = vmatprep.subr.mxu0 0.0
        %995 = vmatpush1.msra.mxu0 0.0
        %996 = vmatprep.subr.mxu0 0.0
        %997 = vmatpush1.msra.mxu0 0.0
        %998 = vmatprep.subr.mxu0 0.0
        %999 = vmatpush1.msra.mxu0 0.0
        %1000 = vmatprep.subr.mxu0 0.0
        %1001 = vmatpush1.msra.mxu0 0.0
        %1002 = vmatprep.subr.mxu0 0.0
        %1003 = vmatpush1.msra.mxu0 0.0
        %1004 = vmatprep.subr.mxu0 0.0
        %1005 = vmatpush1.msra.mxu0 0.0
        %1006 = vmatprep.subr.mxu0 0.0
        %1007 = vmatpush1.msra.mxu0 0.0
        %1008 = vmatprep.subr.mxu0 0.0
        %1009 = vmatpush1.msra.mxu0 0.0
        %1010 = vmatprep.subr.mxu0 0.0
        %1011 = vmatpush1.msra.mxu0 0.0
        %1012 = vmatprep.subr.mxu0 0.0
        %1013 = vmatpush1.msra.mxu0 0.0
        %1014 = vmatprep.subr.mxu0 0.0
        %1015 = vmatpush1.msra.mxu0 0.0
        %1016 = vmatprep.subr.mxu0 0.0
        %1017 = vmatpush1.msra.mxu0 0.0
        %1018 = vmatprep.subr.mxu0 0.0
        %1019 = vmatpush1.msra.mxu0 0.0
        %1020 = vmatprep.subr.mxu0 0.0
        %1021 = vmatpush1.msra.mxu0 0.0
        %1022 = vmatprep.subr.mxu0 0.0
        %1023 = vmatpush1.msra.mxu0 0.0
        %1024 = vmatprep.subr.mxu0 0.0
        %1025 = vmatpush1.msra.mxu0 0.0
        %1026 = vmatprep.subr.mxu0 0.0
        %1027 = vmatpush1.msra.mxu0 0.0
        %1028 = vmatprep.subr.mxu0 0.0
        %1029 = vmatpush1.msra.mxu0 0.0
        %1030 = vmatprep.subr.mxu0 0.0
        %1031 = vmatpush1.msra.mxu0 0.0
        %1032 = vmatprep.subr.mxu0 0.0
        %1033 = vmatpush1.msra.mxu0 0.0
        %1034 = vmatprep.subr.mxu0 0.0
        %1035 = vmatpush1.msra.mxu0 0.0
        %1036 = vmatprep.subr.mxu0 0.0
        %1037 = vmatpush1.msra.mxu0 0.0
        %1038 = vmatprep.subr.mxu0 0.0
        %1039 = vmatpush1.msra.mxu0 0.0
        %1040 = vmatprep.mubr.f32.mxu0 0.0
        %1041 = vmatmul.mubr.f32.gmra.mrb[0].mxu0 %v896
        %v1042 = vpop.f32.mrb[0].mxu0
        %v1043 = vadd.f32 0.0, %v1042
        %v1044 = vpop.f32.mrb[0].mxu0
        %1045 = vmatprep.mubr.f32.mxu0 0.0
        %1046 = vmatmul.mubr.f32.gmra.mrb[0].mxu0 %v899
        %v1047 = vpop.f32.mrb[0].mxu0
        %v1048 = vadd.f32 0.0, %v1047
        %v1049 = vpop.f32.mrb[0].mxu0
        %1050 = vdwg.mxu0
        %1051 = vmatprep.subr.mxu0 0.0
        %1052 = vmatpush1.msra.mxu0 %v767
        %1053 = vmatprep.subr.mxu0 0.0
        %1054 = vmatpush1.msra.mxu0 %v772
        %1055 = vmatprep.subr.mxu0 0.0
        %1056 = vmatpush1.msra.mxu0 0.0
        %1057 = vmatprep.subr.mxu0 0.0
        %1058 = vmatpush1.msra.mxu0 0.0
        %1059 = vmatprep.subr.mxu0 0.0
        %1060 = vmatpush1.msra.mxu0 0.0
        %1061 = vmatprep.subr.mxu0 0.0
        %1062 = vmatpush1.msra.mxu0 0.0
        %1063 = vmatprep.subr.mxu0 0.0
        %1064 = vmatpush1.msra.mxu0 0.0
        %1065 = vmatprep.subr.mxu0 0.0
        %1066 = vmatpush1.msra.mxu0 0.0
        %1067 = vmatprep.subr.mxu0 0.0
        %1068 = vmatpush1.msra.mxu0 0.0
        %1069 = vmatprep.subr.mxu0 0.0
        %1070 = vmatpush1.msra.mxu0 0.0
        %1071 = vmatprep.subr.mxu0 0.0
        %1072 = vmatpush1.msra.mxu0 0.0
        %1073 = vmatprep.subr.mxu0 0.0
        %1074 = vmatpush1.msra.mxu0 0.0
        %1075 = vmatprep.subr.mxu0 0.0
        %1076 = vmatpush1.msra.mxu0 0.0
        %1077 = vmatprep.subr.mxu0 0.0
        %1078 = vmatpush1.msra.mxu0 0.0
        %1079 = vmatprep.subr.mxu0 0.0
        %1080 = vmatpush1.msra.mxu0 0.0
        %1081 = vmatprep.subr.mxu0 0.0
        %1082 = vmatpush1.msra.mxu0 0.0
        %1083 = vmatprep.subr.mxu0 0.0
        %1084 = vmatpush1.msra.mxu0 0.0
        %1085 = vmatprep.subr.mxu0 0.0
        %1086 = vmatpush1.msra.mxu0 0.0
        %1087 = vmatprep.subr.mxu0 0.0
        %1088 = vmatpush1.msra.mxu0 0.0
        %1089 = vmatprep.subr.mxu0 0.0
        %1090 = vmatpush1.msra.mxu0 0.0
        %1091 = vmatprep.subr.mxu0 0.0
        %1092 = vmatpush1.msra.mxu0 0.0
        %1093 = vmatprep.subr.mxu0 0.0
        %1094 = vmatpush1.msra.mxu0 0.0
        %1095 = vmatprep.subr.mxu0 0.0
        %1096 = vmatpush1.msra.mxu0 0.0
        %1097 = vmatprep.subr.mxu0 0.0
        %1098 = vmatpush1.msra.mxu0 0.0
        %1099 = vmatprep.subr.mxu0 0.0
        %1100 = vmatpush1.msra.mxu0 0.0
        %1101 = vmatprep.subr.mxu0 0.0
        %1102 = vmatpush1.msra.mxu0 0.0
        %1103 = vmatprep.subr.mxu0 0.0
        %1104 = vmatpush1.msra.mxu0 0.0
        %1105 = vmatprep.subr.mxu0 0.0
        %1106 = vmatpush1.msra.mxu0 0.0
        %1107 = vmatprep.subr.mxu0 0.0
        %1108 = vmatpush1.msra.mxu0 0.0
        %1109 = vmatprep.subr.mxu0 0.0
        %1110 = vmatpush1.msra.mxu0 0.0
        %1111 = vmatprep.subr.mxu0 0.0
        %1112 = vmatpush1.msra.mxu0 0.0
        %1113 = vmatprep.subr.mxu0 0.0
        %1114 = vmatpush1.msra.mxu0 0.0
        %1115 = vmatprep.mubr.f32.mxu0 0.0
        %1116 = vmatmul.mubr.f32.gmra.mrb[0].mxu0 %v896
        %v1117 = vpop.f32.mrb[0].mxu0
        %v1118 = vadd.f32 0.0, %v1117
        %v1119 = vpop.f32.mrb[0].mxu0
        %1120 = vmatprep.mubr.f32.mxu0 0.0
        %1121 = vmatmul.mubr.f32.gmra.mrb[0].mxu0 %v899
        %v1122 = vpop.f32.mrb[0].mxu0
        %v1123 = vadd.f32 0.0, %v1122
        %v1124 = vpop.f32.mrb[0].mxu0
        %1125 = vdwg.mxu0
        %1126 = vmatprep.subr.mxu0 0.0
        %1127 = vmatpush1.msra.mxu0 %v777
        %1128 = vmatprep.subr.mxu0 0.0
        %1129 = vmatpush1.msra.mxu0 %v782
        %1130 = vmatprep.subr.mxu0 0.0
        %1131 = vmatpush1.msra.mxu0 0.0
        %1132 = vmatprep.subr.mxu0 0.0
        %1133 = vmatpush1.msra.mxu0 0.0
        %1134 = vmatprep.subr.mxu0 0.0
        %1135 = vmatpush1.msra.mxu0 0.0
        %1136 = vmatprep.subr.mxu0 0.0
        %1137 = vmatpush1.msra.mxu0 0.0
        %1138 = vmatprep.subr.mxu0 0.0
        %1139 = vmatpush1.msra.mxu0 0.0
        %1140 = vmatprep.subr.mxu0 0.0
        %1141 = vmatpush1.msra.mxu0 0.0
        %1142 = vmatprep.subr.mxu0 0.0
        %1143 = vmatpush1.msra.mxu0 0.0
        %1144 = vmatprep.subr.mxu0 0.0
        %1145 = vmatpush1.msra.mxu0 0.0
        %1146 = vmatprep.subr.mxu0 0.0
        %1147 = vmatpush1.msra.mxu0 0.0
        %1148 = vmatprep.subr.mxu0 0.0
        %1149 = vmatpush1.msra.mxu0 0.0
        %1150 = vmatprep.subr.mxu0 0.0
        %1151 = vmatpush1.msra.mxu0 0.0
        %1152 = vmatprep.subr.mxu0 0.0
        %1153 = vmatpush1.msra.mxu0 0.0
        %1154 = vmatprep.subr.mxu0 0.0
        %1155 = vmatpush1.msra.mxu0 0.0
        %1156 = vmatprep.subr.mxu0 0.0
        %1157 = vmatpush1.msra.mxu0 0.0
        %1158 = vmatprep.subr.mxu0 0.0
        %1159 = vmatpush1.msra.mxu0 0.0
        %1160 = vmatprep.subr.mxu0 0.0
        %1161 = vmatpush1.msra.mxu0 0.0
        %1162 = vmatprep.subr.mxu0 0.0
        %1163 = vmatpush1.msra.mxu0 0.0
        %1164 = vmatprep.subr.mxu0 0.0
        %1165 = vmatpush1.msra.mxu0 0.0
        %1166 = vmatprep.subr.mxu0 0.0
        %1167 = vmatpush1.msra.mxu0 0.0
        %1168 = vmatprep.subr.mxu0 0.0
        %1169 = vmatpush1.msra.mxu0 0.0
        %1170 = vmatprep.subr.mxu0 0.0
        %1171 = vmatpush1.msra.mxu0 0.0
        %1172 = vmatprep.subr.mxu0 0.0
        %1173 = vmatpush1.msra.mxu0 0.0
        %1174 = vmatprep.subr.mxu0 0.0
        %1175 = vmatpush1.msra.mxu0 0.0
        %1176 = vmatprep.subr.mxu0 0.0
        %1177 = vmatpush1.msra.mxu0 0.0
        %1178 = vmatprep.subr.mxu0 0.0
        %1179 = vmatpush1.msra.mxu0 0.0
        %1180 = vmatprep.subr.mxu0 0.0
        %1181 = vmatpush1.msra.mxu0 0.0
        %1182 = vmatprep.subr.mxu0 0.0
        %1183 = vmatpush1.msra.mxu0 0.0
        %1184 = vmatprep.subr.mxu0 0.0
        %1185 = vmatpush1.msra.mxu0 0.0
        %1186 = vmatprep.subr.mxu0 0.0
        %1187 = vmatpush1.msra.mxu0 0.0
        %1188 = vmatprep.subr.mxu0 0.0
        %1189 = vmatpush1.msra.mxu0 0.0
        %1190 = vmatprep.mubr.f32.mxu0 0.0
        %1191 = vmatmul.mubr.f32.gmra.mrb[0].mxu0 %v896
        %v1192 = vpop.f32.mrb[0].mxu0
        %v1193 = vadd.f32 0.0, %v1192
        %v1194 = vpop.f32.mrb[0].mxu0
        %1195 = vmatprep.mubr.f32.mxu0 0.0
        %1196 = vmatmul.mubr.f32.gmra.mrb[0].mxu0 %v899
        %v1197 = vpop.f32.mrb[0].mxu0
        %v1198 = vadd.f32 0.0, %v1197
        %v1199 = vpop.f32.mrb[0].mxu0
        %1200 = vdwg.mxu0
        %1201 = vmatprep.subr.mxu0 0.0
        %1202 = vmatpush1.msra.mxu0 %v787
        %1203 = vmatprep.subr.mxu0 0.0
        %1204 = vmatpush1.msra.mxu0 %v792
        %1205 = vmatprep.subr.mxu0 0.0
        %1206 = vmatpush1.msra.mxu0 0.0
        %1207 = vmatprep.subr.mxu0 0.0
        %1208 = vmatpush1.msra.mxu0 0.0
        %1209 = vmatprep.subr.mxu0 0.0
        %1210 = vmatpush1.msra.mxu0 0.0
        %1211 = vmatprep.subr.mxu0 0.0
        %1212 = vmatpush1.msra.mxu0 0.0
        %1213 = vmatprep.subr.mxu0 0.0
        %1214 = vmatpush1.msra.mxu0 0.0
        %1215 = vmatprep.subr.mxu0 0.0
        %1216 = vmatpush1.msra.mxu0 0.0
        %1217 = vmatprep.subr.mxu0 0.0
        %1218 = vmatpush1.msra.mxu0 0.0
        %1219 = vmatprep.subr.mxu0 0.0
        %1220 = vmatpush1.msra.mxu0 0.0
        %1221 = vmatprep.subr.mxu0 0.0
        %1222 = vmatpush1.msra.mxu0 0.0
        %1223 = vmatprep.subr.mxu0 0.0
        %1224 = vmatpush1.msra.mxu0 0.0
        %1225 = vmatprep.subr.mxu0 0.0
        %1226 = vmatpush1.msra.mxu0 0.0
        %1227 = vmatprep.subr.mxu0 0.0
        %1228 = vmatpush1.msra.mxu0 0.0
        %1229 = vmatprep.subr.mxu0 0.0
        %1230 = vmatpush1.msra.mxu0 0.0
        %1231 = vmatprep.subr.mxu0 0.0
        %1232 = vmatpush1.msra.mxu0 0.0
        %1233 = vmatprep.subr.mxu0 0.0
        %1234 = vmatpush1.msra.mxu0 0.0
        %1235 = vmatprep.subr.mxu0 0.0
        %1236 = vmatpush1.msra.mxu0 0.0
        %1237 = vmatprep.subr.mxu0 0.0
        %1238 = vmatpush1.msra.mxu0 0.0
        %1239 = vmatprep.subr.mxu0 0.0
        %1240 = vmatpush1.msra.mxu0 0.0
        %1241 = vmatprep.subr.mxu0 0.0
        %1242 = vmatpush1.msra.mxu0 0.0
        %1243 = vmatprep.subr.mxu0 0.0
        %1244 = vmatpush1.msra.mxu0 0.0
        %1245 = vmatprep.subr.mxu0 0.0
        %1246 = vmatpush1.msra.mxu0 0.0
        %1247 = vmatprep.subr.mxu0 0.0
        %1248 = vmatpush1.msra.mxu0 0.0
        %1249 = vmatprep.subr.mxu0 0.0
        %1250 = vmatpush1.msra.mxu0 0.0
        %1251 = vmatprep.subr.mxu0 0.0
        %1252 = vmatpush1.msra.mxu0 0.0
        %1253 = vmatprep.subr.mxu0 0.0
        %1254 = vmatpush1.msra.mxu0 0.0
        %1255 = vmatprep.subr.mxu0 0.0
        %1256 = vmatpush1.msra.mxu0 0.0
        %1257 = vmatprep.subr.mxu0 0.0
        %1258 = vmatpush1.msra.mxu0 0.0
        %1259 = vmatprep.subr.mxu0 0.0
        %1260 = vmatpush1.msra.mxu0 0.0
        %1261 = vmatprep.subr.mxu0 0.0
        %1262 = vmatpush1.msra.mxu0 0.0
        %1263 = vmatprep.subr.mxu0 0.0
        %1264 = vmatpush1.msra.mxu0 0.0
        %1265 = vmatprep.mubr.f32.mxu0 0.0
        %1266 = vmatmul.mubr.f32.gmra.mrb[0].mxu0 %v896
        %v1267 = vpop.f32.mrb[0].mxu0
        %v1268 = vadd.f32 0.0, %v1267
        %v1269 = vpop.f32.mrb[0].mxu0
        %1270 = vmatprep.mubr.f32.mxu0 0.0
        %1271 = vmatmul.mubr.f32.gmra.mrb[0].mxu0 %v899
        %v1272 = vpop.f32.mrb[0].mxu0
        %v1273 = vadd.f32 0.0, %v1272
        %v1274 = vpop.f32.mrb[0].mxu0
        %1275 = vdwg.mxu0
        %1276 = vmatprep.subr.mxu0 0.0
        %1277 = vmatpush1.msra.mxu0 %v797
        %1278 = vmatprep.subr.mxu0 0.0
        %1279 = vmatpush1.msra.mxu0 %v802
        %1280 = vmatprep.subr.mxu0 0.0
        %1281 = vmatpush1.msra.mxu0 0.0
        %1282 = vmatprep.subr.mxu0 0.0
        %1283 = vmatpush1.msra.mxu0 0.0
        %1284 = vmatprep.subr.mxu0 0.0
        %1285 = vmatpush1.msra.mxu0 0.0
        %1286 = vmatprep.subr.mxu0 0.0
        %1287 = vmatpush1.msra.mxu0 0.0
        %1288 = vmatprep.subr.mxu0 0.0
        %1289 = vmatpush1.msra.mxu0 0.0
        %1290 = vmatprep.subr.mxu0 0.0
        %1291 = vmatpush1.msra.mxu0 0.0
        %1292 = vmatprep.subr.mxu0 0.0
        %1293 = vmatpush1.msra.mxu0 0.0
        %1294 = vmatprep.subr.mxu0 0.0
        %1295 = vmatpush1.msra.mxu0 0.0
        %1296 = vmatprep.subr.mxu0 0.0
        %1297 = vmatpush1.msra.mxu0 0.0
        %1298 = vmatprep.subr.mxu0 0.0
        %1299 = vmatpush1.msra.mxu0 0.0
        %1300 = vmatprep.subr.mxu0 0.0
        %1301 = vmatpush1.msra.mxu0 0.0
        %1302 = vmatprep.subr.mxu0 0.0
        %1303 = vmatpush1.msra.mxu0 0.0
        %1304 = vmatprep.subr.mxu0 0.0
        %1305 = vmatpush1.msra.mxu0 0.0
        %1306 = vmatprep.subr.mxu0 0.0
        %1307 = vmatpush1.msra.mxu0 0.0
        %1308 = vmatprep.subr.mxu0 0.0
        %1309 = vmatpush1.msra.mxu0 0.0
        %1310 = vmatprep.subr.mxu0 0.0
        %1311 = vmatpush1.msra.mxu0 0.0
        %1312 = vmatprep.subr.mxu0 0.0
        %1313 = vmatpush1.msra.mxu0 0.0
        %1314 = vmatprep.subr.mxu0 0.0
        %1315 = vmatpush1.msra.mxu0 0.0
        %1316 = vmatprep.subr.mxu0 0.0
        %1317 = vmatpush1.msra.mxu0 0.0
        %1318 = vmatprep.subr.mxu0 0.0
        %1319 = vmatpush1.msra.mxu0 0.0
        %1320 = vmatprep.subr.mxu0 0.0
        %1321 = vmatpush1.msra.mxu0 0.0
        %1322 = vmatprep.subr.mxu0 0.0
        %1323 = vmatpush1.msra.mxu0 0.0
        %1324 = vmatprep.subr.mxu0 0.0
        %1325 = vmatpush1.msra.mxu0 0.0
        %1326 = vmatprep.subr.mxu0 0.0
        %1327 = vmatpush1.msra.mxu0 0.0
        %1328 = vmatprep.subr.mxu0 0.0
        %1329 = vmatpush1.msra.mxu0 0.0
        %1330 = vmatprep.subr.mxu0 0.0
        %1331 = vmatpush1.msra.mxu0 0.0
        %1332 = vmatprep.subr.mxu0 0.0
        %1333 = vmatpush1.msra.mxu0 0.0
        %1334 = vmatprep.subr.mxu0 0.0
        %1335 = vmatpush1.msra.mxu0 0.0
        %1336 = vmatprep.subr.mxu0 0.0
        %1337 = vmatpush1.msra.mxu0 0.0
        %1338 = vmatprep.subr.mxu0 0.0
        %1339 = vmatpush1.msra.mxu0 0.0
        %1340 = vmatprep.mubr.f32.mxu0 0.0
        %1341 = vmatmul.mubr.f32.gmra.mrb[0].mxu0 %v896
        %v1342 = vpop.f32.mrb[0].mxu0
        %v1343 = vadd.f32 0.0, %v1342
        %v1344 = vpop.f32.mrb[0].mxu0
        %1345 = vmatprep.mubr.f32.mxu0 0.0
        %1346 = vmatmul.mubr.f32.gmra.mrb[0].mxu0 %v899
        %v1347 = vpop.f32.mrb[0].mxu0
        %v1348 = vadd.f32 0.0, %v1347
        %v1349 = vpop.f32.mrb[0].mxu0
        %1350 = vdwg.mxu0
        %1351 = vmatprep.subr.mxu0 0.0
        %1352 = vmatpush1.msra.mxu0 %v807
        %1353 = vmatprep.subr.mxu0 0.0
        %1354 = vmatpush1.msra.mxu0 %v812
        %1355 = vmatprep.subr.mxu0 0.0
        %1356 = vmatpush1.msra.mxu0 0.0
        %1357 = vmatprep.subr.mxu0 0.0
        %1358 = vmatpush1.msra.mxu0 0.0
        %1359 = vmatprep.subr.mxu0 0.0
        %1360 = vmatpush1.msra.mxu0 0.0
        %1361 = vmatprep.subr.mxu0 0.0
        %1362 = vmatpush1.msra.mxu0 0.0
        %1363 = vmatprep.subr.mxu0 0.0
        %1364 = vmatpush1.msra.mxu0 0.0
        %1365 = vmatprep.subr.mxu0 0.0
        %1366 = vmatpush1.msra.mxu0 0.0
        %1367 = vmatprep.subr.mxu0 0.0
        %1368 = vmatpush1.msra.mxu0 0.0
        %1369 = vmatprep.subr.mxu0 0.0
        %1370 = vmatpush1.msra.mxu0 0.0
        %1371 = vmatprep.subr.mxu0 0.0
        %1372 = vmatpush1.msra.mxu0 0.0
        %1373 = vmatprep.subr.mxu0 0.0
        %1374 = vmatpush1.msra.mxu0 0.0
        %1375 = vmatprep.subr.mxu0 0.0
        %1376 = vmatpush1.msra.mxu0 0.0
        %1377 = vmatprep.subr.mxu0 0.0
        %1378 = vmatpush1.msra.mxu0 0.0
        %1379 = vmatprep.subr.mxu0 0.0
        %1380 = vmatpush1.msra.mxu0 0.0
        %1381 = vmatprep.subr.mxu0 0.0
        %1382 = vmatpush1.msra.mxu0 0.0
        %1383 = vmatprep.subr.mxu0 0.0
        %1384 = vmatpush1.msra.mxu0 0.0
        %1385 = vmatprep.subr.mxu0 0.0
        %1386 = vmatpush1.msra.mxu0 0.0
        %1387 = vmatprep.subr.mxu0 0.0
        %1388 = vmatpush1.msra.mxu0 0.0
        %1389 = vmatprep.subr.mxu0 0.0
        %1390 = vmatpush1.msra.mxu0 0.0
        %1391 = vmatprep.subr.mxu0 0.0
        %1392 = vmatpush1.msra.mxu0 0.0
        %1393 = vmatprep.subr.mxu0 0.0
        %1394 = vmatpush1.msra.mxu0 0.0
        %1395 = vmatprep.subr.mxu0 0.0
        %1396 = vmatpush1.msra.mxu0 0.0
        %1397 = vmatprep.subr.mxu0 0.0
        %1398 = vmatpush1.msra.mxu0 0.0
        %1399 = vmatprep.subr.mxu0 0.0
        %1400 = vmatpush1.msra.mxu0 0.0
        %1401 = vmatprep.subr.mxu0 0.0
        %1402 = vmatpush1.msra.mxu0 0.0
        %1403 = vmatprep.subr.mxu0 0.0
        %1404 = vmatpush1.msra.mxu0 0.0
        %1405 = vmatprep.subr.mxu0 0.0
        %1406 = vmatpush1.msra.mxu0 0.0
        %1407 = vmatprep.subr.mxu0 0.0
        %1408 = vmatpush1.msra.mxu0 0.0
        %1409 = vmatprep.subr.mxu0 0.0
        %1410 = vmatpush1.msra.mxu0 0.0
        %1411 = vmatprep.subr.mxu0 0.0
        %1412 = vmatpush1.msra.mxu0 0.0
        %1413 = vmatprep.subr.mxu0 0.0
        %1414 = vmatpush1.msra.mxu0 0.0
        %1415 = vmatprep.mubr.f32.mxu0 0.0
        %1416 = vmatmul.mubr.f32.gmra.mrb[0].mxu0 %v896
        %v1417 = vpop.f32.mrb[0].mxu0
        %v1418 = vadd.f32 0.0, %v1417
        %v1419 = vpop.f32.mrb[0].mxu0
        %1420 = vmatprep.mubr.f32.mxu0 0.0
        %1421 = vmatmul.mubr.f32.gmra.mrb[0].mxu0 %v899
        %v1422 = vpop.f32.mrb[0].mxu0
        %v1423 = vadd.f32 0.0, %v1422
        %v1424 = vpop.f32.mrb[0].mxu0
        %1425 = vdwg.mxu0
        %1426 = vmatprep.subr.mxu0 0.0
        %1427 = vmatpush1.msra.mxu0 %v817
        %1428 = vmatprep.subr.mxu0 0.0
        %1429 = vmatpush1.msra.mxu0 %v822
        %1430 = vmatprep.subr.mxu0 0.0
        %1431 = vmatpush1.msra.mxu0 0.0
        %1432 = vmatprep.subr.mxu0 0.0
        %1433 = vmatpush1.msra.mxu0 0.0
        %1434 = vmatprep.subr.mxu0 0.0
        %1435 = vmatpush1.msra.mxu0 0.0
        %1436 = vmatprep.subr.mxu0 0.0
        %1437 = vmatpush1.msra.mxu0 0.0
        %1438 = vmatprep.subr.mxu0 0.0
        %1439 = vmatpush1.msra.mxu0 0.0
        %1440 = vmatprep.subr.mxu0 0.0
        %1441 = vmatpush1.msra.mxu0 0.0
        %1442 = vmatprep.subr.mxu0 0.0
        %1443 = vmatpush1.msra.mxu0 0.0
        %1444 = vmatprep.subr.mxu0 0.0
        %1445 = vmatpush1.msra.mxu0 0.0
        %1446 = vmatprep.subr.mxu0 0.0
        %1447 = vmatpush1.msra.mxu0 0.0
        %1448 = vmatprep.subr.mxu0 0.0
        %1449 = vmatpush1.msra.mxu0 0.0
        %1450 = vmatprep.subr.mxu0 0.0
        %1451 = vmatpush1.msra.mxu0 0.0
        %1452 = vmatprep.subr.mxu0 0.0
        %1453 = vmatpush1.msra.mxu0 0.0
        %1454 = vmatprep.subr.mxu0 0.0
        %1455 = vmatpush1.msra.mxu0 0.0
        %1456 = vmatprep.subr.mxu0 0.0
        %1457 = vmatpush1.msra.mxu0 0.0
        %1458 = vmatprep.subr.mxu0 0.0
        %1459 = vmatpush1.msra.mxu0 0.0
        %1460 = vmatprep.subr.mxu0 0.0
        %1461 = vmatpush1.msra.mxu0 0.0
        %1462 = vmatprep.subr.mxu0 0.0
        %1463 = vmatpush1.msra.mxu0 0.0
        %1464 = vmatprep.subr.mxu0 0.0
        %1465 = vmatpush1.msra.mxu0 0.0
        %1466 = vmatprep.subr.mxu0 0.0
        %1467 = vmatpush1.msra.mxu0 0.0
        %1468 = vmatprep.subr.mxu0 0.0
        %1469 = vmatpush1.msra.mxu0 0.0
        %1470 = vmatprep.subr.mxu0 0.0
        %1471 = vmatpush1.msra.mxu0 0.0
        %1472 = vmatprep.subr.mxu0 0.0
        %1473 = vmatpush1.msra.mxu0 0.0
        %1474 = vmatprep.subr.mxu0 0.0
        %1475 = vmatpush1.msra.mxu0 0.0
        %1476 = vmatprep.subr.mxu0 0.0
        %1477 = vmatpush1.msra.mxu0 0.0
        %1478 = vmatprep.subr.mxu0 0.0
        %1479 = vmatpush1.msra.mxu0 0.0
        %1480 = vmatprep.subr.mxu0 0.0
        %1481 = vmatpush1.msra.mxu0 0.0
        %1482 = vmatprep.subr.mxu0 0.0
        %1483 = vmatpush1.msra.mxu0 0.0
        %1484 = vmatprep.subr.mxu0 0.0
        %1485 = vmatpush1.msra.mxu0 0.0
        %1486 = vmatprep.subr.mxu0 0.0
        %1487 = vmatpush1.msra.mxu0 0.0
        %1488 = vmatprep.subr.mxu0 0.0
        %1489 = vmatpush1.msra.mxu0 0.0
        %1490 = vmatprep.mubr.f32.mxu0 0.0
        %1491 = vmatmul.mubr.f32.gmra.mrb[0].mxu0 %v896
        %v1492 = vpop.f32.mrb[0].mxu0
        %v1493 = vadd.f32 0.0, %v1492
        %v1494 = vpop.f32.mrb[0].mxu0
        %1495 = vmatprep.mubr.f32.mxu0 0.0
        %1496 = vmatmul.mubr.f32.gmra.mrb[0].mxu0 %v899
        %v1497 = vpop.f32.mrb[0].mxu0
        %v1498 = vadd.f32 0.0, %v1497
        %v1499 = vpop.f32.mrb[0].mxu0
        %1500 = vdwg.mxu0
        %1501 = vmatprep.subr.mxu0 0.0
        %1502 = vmatpush1.msra.mxu0 %v827
        %1503 = vmatprep.subr.mxu0 0.0
        %1504 = vmatpush1.msra.mxu0 %v832
        %1505 = vmatprep.subr.mxu0 0.0
        %1506 = vmatpush1.msra.mxu0 0.0
        %1507 = vmatprep.subr.mxu0 0.0
        %1508 = vmatpush1.msra.mxu0 0.0
        %1509 = vmatprep.subr.mxu0 0.0
        %1510 = vmatpush1.msra.mxu0 0.0
        %1511 = vmatprep.subr.mxu0 0.0
        %1512 = vmatpush1.msra.mxu0 0.0
        %1513 = vmatprep.subr.mxu0 0.0
        %1514 = vmatpush1.msra.mxu0 0.0
        %1515 = vmatprep.subr.mxu0 0.0
        %1516 = vmatpush1.msra.mxu0 0.0
        %1517 = vmatprep.subr.mxu0 0.0
        %1518 = vmatpush1.msra.mxu0 0.0
        %1519 = vmatprep.subr.mxu0 0.0
        %1520 = vmatpush1.msra.mxu0 0.0
        %1521 = vmatprep.subr.mxu0 0.0
        %1522 = vmatpush1.msra.mxu0 0.0
        %1523 = vmatprep.subr.mxu0 0.0
        %1524 = vmatpush1.msra.mxu0 0.0
        %1525 = vmatprep.subr.mxu0 0.0
        %1526 = vmatpush1.msra.mxu0 0.0
        %1527 = vmatprep.subr.mxu0 0.0
        %1528 = vmatpush1.msra.mxu0 0.0
        %1529 = vmatprep.subr.mxu0 0.0
        %1530 = vmatpush1.msra.mxu0 0.0
        %1531 = vmatprep.subr.mxu0 0.0
        %1532 = vmatpush1.msra.mxu0 0.0
        %1533 = vmatprep.subr.mxu0 0.0
        %1534 = vmatpush1.msra.mxu0 0.0
        %1535 = vmatprep.subr.mxu0 0.0
        %1536 = vmatpush1.msra.mxu0 0.0
        %1537 = vmatprep.subr.mxu0 0.0
        %1538 = vmatpush1.msra.mxu0 0.0
        %1539 = vmatprep.subr.mxu0 0.0
        %1540 = vmatpush1.msra.mxu0 0.0
        %1541 = vmatprep.subr.mxu0 0.0
        %1542 = vmatpush1.msra.mxu0 0.0
        %1543 = vmatprep.subr.mxu0 0.0
        %1544 = vmatpush1.msra.mxu0 0.0
        %1545 = vmatprep.subr.mxu0 0.0
        %1546 = vmatpush1.msra.mxu0 0.0
        %1547 = vmatprep.subr.mxu0 0.0
        %1548 = vmatpush1.msra.mxu0 0.0
        %1549 = vmatprep.subr.mxu0 0.0
        %1550 = vmatpush1.msra.mxu0 0.0
        %1551 = vmatprep.subr.mxu0 0.0
        %1552 = vmatpush1.msra.mxu0 0.0
        %1553 = vmatprep.subr.mxu0 0.0
        %1554 = vmatpush1.msra.mxu0 0.0
        %1555 = vmatprep.subr.mxu0 0.0
        %1556 = vmatpush1.msra.mxu0 0.0
        %1557 = vmatprep.subr.mxu0 0.0
        %1558 = vmatpush1.msra.mxu0 0.0
        %1559 = vmatprep.subr.mxu0 0.0
        %1560 = vmatpush1.msra.mxu0 0.0
        %1561 = vmatprep.subr.mxu0 0.0
        %1562 = vmatpush1.msra.mxu0 0.0
        %1563 = vmatprep.subr.mxu0 0.0
        %1564 = vmatpush1.msra.mxu0 0.0
        %1565 = vmatprep.mubr.f32.mxu0 0.0
        %1566 = vmatmul.mubr.f32.gmra.mrb[0].mxu0 %v896
        %v1567 = vpop.f32.mrb[0].mxu0
        %v1568 = vadd.f32 0.0, %v1567
        %v1569 = vpop.f32.mrb[0].mxu0
        %1570 = vmatprep.mubr.f32.mxu0 0.0
        %1571 = vmatmul.mubr.f32.gmra.mrb[0].mxu0 %v899
        %v1572 = vpop.f32.mrb[0].mxu0
        %v1573 = vadd.f32 0.0, %v1572
        %v1574 = vpop.f32.mrb[0].mxu0
        %1575 = vdwg.mxu0
        %1576 = vmatprep.subr.mxu0 0.0
        %1577 = vmatpush1.msra.mxu0 %v837
        %1578 = vmatprep.subr.mxu0 0.0
        %1579 = vmatpush1.msra.mxu0 %v842
        %1580 = vmatprep.subr.mxu0 0.0
        %1581 = vmatpush1.msra.mxu0 0.0
        %1582 = vmatprep.subr.mxu0 0.0
        %1583 = vmatpush1.msra.mxu0 0.0
        %1584 = vmatprep.subr.mxu0 0.0
        %1585 = vmatpush1.msra.mxu0 0.0
        %1586 = vmatprep.subr.mxu0 0.0
        %1587 = vmatpush1.msra.mxu0 0.0
        %1588 = vmatprep.subr.mxu0 0.0
        %1589 = vmatpush1.msra.mxu0 0.0
        %1590 = vmatprep.subr.mxu0 0.0
        %1591 = vmatpush1.msra.mxu0 0.0
        %1592 = vmatprep.subr.mxu0 0.0
        %1593 = vmatpush1.msra.mxu0 0.0
        %1594 = vmatprep.subr.mxu0 0.0
        %1595 = vmatpush1.msra.mxu0 0.0
        %1596 = vmatprep.subr.mxu0 0.0
        %1597 = vmatpush1.msra.mxu0 0.0
        %1598 = vmatprep.subr.mxu0 0.0
        %1599 = vmatpush1.msra.mxu0 0.0
        %1600 = vmatprep.subr.mxu0 0.0
        %1601 = vmatpush1.msra.mxu0 0.0
        %1602 = vmatprep.subr.mxu0 0.0
        %1603 = vmatpush1.msra.mxu0 0.0
        %1604 = vmatprep.subr.mxu0 0.0
        %1605 = vmatpush1.msra.mxu0 0.0
        %1606 = vmatprep.subr.mxu0 0.0
        %1607 = vmatpush1.msra.mxu0 0.0
        %1608 = vmatprep.subr.mxu0 0.0
        %1609 = vmatpush1.msra.mxu0 0.0
        %1610 = vmatprep.subr.mxu0 0.0
        %1611 = vmatpush1.msra.mxu0 0.0
        %1612 = vmatprep.subr.mxu0 0.0
        %1613 = vmatpush1.msra.mxu0 0.0
        %1614 = vmatprep.subr.mxu0 0.0
        %1615 = vmatpush1.msra.mxu0 0.0
        %1616 = vmatprep.subr.mxu0 0.0
        %1617 = vmatpush1.msra.mxu0 0.0
        %1618 = vmatprep.subr.mxu0 0.0
        %1619 = vmatpush1.msra.mxu0 0.0
        %1620 = vmatprep.subr.mxu0 0.0
        %1621 = vmatpush1.msra.mxu0 0.0
        %1622 = vmatprep.subr.mxu0 0.0
        %1623 = vmatpush1.msra.mxu0 0.0
        %1624 = vmatprep.subr.mxu0 0.0
        %1625 = vmatpush1.msra.mxu0 0.0
        %1626 = vmatprep.subr.mxu0 0.0
        %1627 = vmatpush1.msra.mxu0 0.0
        %1628 = vmatprep.subr.mxu0 0.0
        %1629 = vmatpush1.msra.mxu0 0.0
        %1630 = vmatprep.subr.mxu0 0.0
        %1631 = vmatpush1.msra.mxu0 0.0
        %1632 = vmatprep.subr.mxu0 0.0
        %1633 = vmatpush1.msra.mxu0 0.0
        %1634 = vmatprep.subr.mxu0 0.0
        %1635 = vmatpush1.msra.mxu0 0.0
        %1636 = vmatprep.subr.mxu0 0.0
        %1637 = vmatpush1.msra.mxu0 0.0
        %1638 = vmatprep.subr.mxu0 0.0
        %1639 = vmatpush1.msra.mxu0 0.0
        %1640 = vmatprep.mubr.f32.mxu0 0.0
        %1641 = vmatmul.mubr.f32.gmra.mrb[0].mxu0 %v896
        %v1642 = vpop.f32.mrb[0].mxu0
        %v1643 = vadd.f32 0.0, %v1642
        %v1644 = vpop.f32.mrb[0].mxu0
        %1645 = vmatprep.mubr.f32.mxu0 0.0
        %1646 = vmatmul.mubr.f32.gmra.mrb[0].mxu0 %v899
        %v1647 = vpop.f32.mrb[0].mxu0
        %v1648 = vadd.f32 0.0, %v1647
        %v1649 = vpop.f32.mrb[0].mxu0
        %1650 = vdwg.mxu0
        %1651 = vmatprep.subr.mxu0 0.0
        %1652 = vmatpush1.msra.mxu0 %v847
        %1653 = vmatprep.subr.mxu0 0.0
        %1654 = vmatpush1.msra.mxu0 %v852
        %1655 = vmatprep.subr.mxu0 0.0
        %1656 = vmatpush1.msra.mxu0 0.0
        %1657 = vmatprep.subr.mxu0 0.0
        %1658 = vmatpush1.msra.mxu0 0.0
        %1659 = vmatprep.subr.mxu0 0.0
        %1660 = vmatpush1.msra.mxu0 0.0
        %1661 = vmatprep.subr.mxu0 0.0
        %1662 = vmatpush1.msra.mxu0 0.0
        %1663 = vmatprep.subr.mxu0 0.0
        %1664 = vmatpush1.msra.mxu0 0.0
        %1665 = vmatprep.subr.mxu0 0.0
        %1666 = vmatpush1.msra.mxu0 0.0
        %1667 = vmatprep.subr.mxu0 0.0
        %1668 = vmatpush1.msra.mxu0 0.0
        %1669 = vmatprep.subr.mxu0 0.0
        %1670 = vmatpush1.msra.mxu0 0.0
        %1671 = vmatprep.subr.mxu0 0.0
        %1672 = vmatpush1.msra.mxu0 0.0
        %1673 = vmatprep.subr.mxu0 0.0
        %1674 = vmatpush1.msra.mxu0 0.0
        %1675 = vmatprep.subr.mxu0 0.0
        %1676 = vmatpush1.msra.mxu0 0.0
        %1677 = vmatprep.subr.mxu0 0.0
        %1678 = vmatpush1.msra.mxu0 0.0
        %1679 = vmatprep.subr.mxu0 0.0
        %1680 = vmatpush1.msra.mxu0 0.0
        %1681 = vmatprep.subr.mxu0 0.0
        %1682 = vmatpush1.msra.mxu0 0.0
        %1683 = vmatprep.subr.mxu0 0.0
        %1684 = vmatpush1.msra.mxu0 0.0
        %1685 = vmatprep.subr.mxu0 0.0
        %1686 = vmatpush1.msra.mxu0 0.0
        %1687 = vmatprep.subr.mxu0 0.0
        %1688 = vmatpush1.msra.mxu0 0.0
        %1689 = vmatprep.subr.mxu0 0.0
        %1690 = vmatpush1.msra.mxu0 0.0
        %1691 = vmatprep.subr.mxu0 0.0
        %1692 = vmatpush1.msra.mxu0 0.0
        %1693 = vmatprep.subr.mxu0 0.0
        %1694 = vmatpush1.msra.mxu0 0.0
        %1695 = vmatprep.subr.mxu0 0.0
        %1696 = vmatpush1.msra.mxu0 0.0
        %1697 = vmatprep.subr.mxu0 0.0
        %1698 = vmatpush1.msra.mxu0 0.0
        %1699 = vmatprep.subr.mxu0 0.0
        %1700 = vmatpush1.msra.mxu0 0.0
        %1701 = vmatprep.subr.mxu0 0.0
        %1702 = vmatpush1.msra.mxu0 0.0
        %1703 = vmatprep.subr.mxu0 0.0
        %1704 = vmatpush1.msra.mxu0 0.0
        %1705 = vmatprep.subr.mxu0 0.0
        %1706 = vmatpush1.msra.mxu0 0.0
        %1707 = vmatprep.subr.mxu0 0.0
        %1708 = vmatpush1.msra.mxu0 0.0
        %1709 = vmatprep.subr.mxu0 0.0
        %1710 = vmatpush1.msra.mxu0 0.0
        %1711 = vmatprep.subr.mxu0 0.0
        %1712 = vmatpush1.msra.mxu0 0.0
        %1713 = vmatprep.subr.mxu0 0.0
        %1714 = vmatpush1.msra.mxu0 0.0
        %1715 = vmatprep.mubr.f32.mxu0 0.0
        %1716 = vmatmul.mubr.f32.gmra.mrb[0].mxu0 %v896
        %v1717 = vpop.f32.mrb[0].mxu0
        %v1718 = vadd.f32 0.0, %v1717
        %v1719 = vpop.f32.mrb[0].mxu0
        %1720 = vmatprep.mubr.f32.mxu0 0.0
        %1721 = vmatmul.mubr.f32.gmra.mrb[0].mxu0 %v899
        %v1722 = vpop.f32.mrb[0].mxu0
        %v1723 = vadd.f32 0.0, %v1722
        %v1724 = vpop.f32.mrb[0].mxu0
        %1725 = vdwg.mxu0
        %1726 = vmatprep.subr.mxu0 0.0
        %1727 = vmatpush1.msra.mxu0 %v857
        %1728 = vmatprep.subr.mxu0 0.0
        %1729 = vmatpush1.msra.mxu0 %v862
        %1730 = vmatprep.subr.mxu0 0.0
        %1731 = vmatpush1.msra.mxu0 0.0
        %1732 = vmatprep.subr.mxu0 0.0
        %1733 = vmatpush1.msra.mxu0 0.0
        %1734 = vmatprep.subr.mxu0 0.0
        %1735 = vmatpush1.msra.mxu0 0.0
        %1736 = vmatprep.subr.mxu0 0.0
        %1737 = vmatpush1.msra.mxu0 0.0
        %1738 = vmatprep.subr.mxu0 0.0
        %1739 = vmatpush1.msra.mxu0 0.0
        %1740 = vmatprep.subr.mxu0 0.0
        %1741 = vmatpush1.msra.mxu0 0.0
        %1742 = vmatprep.subr.mxu0 0.0
        %1743 = vmatpush1.msra.mxu0 0.0
        %1744 = vmatprep.subr.mxu0 0.0
        %1745 = vmatpush1.msra.mxu0 0.0
        %1746 = vmatprep.subr.mxu0 0.0
        %1747 = vmatpush1.msra.mxu0 0.0
        %1748 = vmatprep.subr.mxu0 0.0
        %1749 = vmatpush1.msra.mxu0 0.0
        %1750 = vmatprep.subr.mxu0 0.0
        %1751 = vmatpush1.msra.mxu0 0.0
        %1752 = vmatprep.subr.mxu0 0.0
        %1753 = vmatpush1.msra.mxu0 0.0
        %1754 = vmatprep.subr.mxu0 0.0
        %1755 = vmatpush1.msra.mxu0 0.0
        %1756 = vmatprep.subr.mxu0 0.0
        %1757 = vmatpush1.msra.mxu0 0.0
        %1758 = vmatprep.subr.mxu0 0.0
        %1759 = vmatpush1.msra.mxu0 0.0
        %1760 = vmatprep.subr.mxu0 0.0
        %1761 = vmatpush1.msra.mxu0 0.0
        %1762 = vmatprep.subr.mxu0 0.0
        %1763 = vmatpush1.msra.mxu0 0.0
        %1764 = vmatprep.subr.mxu0 0.0
        %1765 = vmatpush1.msra.mxu0 0.0
        %1766 = vmatprep.subr.mxu0 0.0
        %1767 = vmatpush1.msra.mxu0 0.0
        %1768 = vmatprep.subr.mxu0 0.0
        %1769 = vmatpush1.msra.mxu0 0.0
        %1770 = vmatprep.subr.mxu0 0.0
        %1771 = vmatpush1.msra.mxu0 0.0
        %1772 = vmatprep.subr.mxu0 0.0
        %1773 = vmatpush1.msra.mxu0 0.0
        %1774 = vmatprep.subr.mxu0 0.0
        %1775 = vmatpush1.msra.mxu0 0.0
        %1776 = vmatprep.subr.mxu0 0.0
        %1777 = vmatpush1.msra.mxu0 0.0
        %1778 = vmatprep.subr.mxu0 0.0
        %1779 = vmatpush1.msra.mxu0 0.0
        %1780 = vmatprep.subr.mxu0 0.0
        %1781 = vmatpush1.msra.mxu0 0.0
        %1782 = vmatprep.subr.mxu0 0.0
        %1783 = vmatpush1.msra.mxu0 0.0
        %1784 = vmatprep.subr.mxu0 0.0
        %1785 = vmatpush1.msra.mxu0 0.0
        %1786 = vmatprep.subr.mxu0 0.0
        %1787 = vmatpush1.msra.mxu0 0.0
        %1788 = vmatprep.subr.mxu0 0.0
        %1789 = vmatpush1.msra.mxu0 0.0
        %1790 = vmatprep.mubr.f32.mxu0 0.0
        %1791 = vmatmul.mubr.f32.gmra.mrb[0].mxu0 %v896
        %v1792 = vpop.f32.mrb[0].mxu0
        %v1793 = vadd.f32 0.0, %v1792
        %v1794 = vpop.f32.mrb[0].mxu0
        %1795 = vmatprep.mubr.f32.mxu0 0.0
        %1796 = vmatmul.mubr.f32.gmra.mrb[0].mxu0 %v899
        %v1797 = vpop.f32.mrb[0].mxu0
        %v1798 = vadd.f32 0.0, %v1797
        %v1799 = vpop.f32.mrb[0].mxu0
        %1800 = vdwg.mxu0
        %1801 = vmatprep.subr.mxu0 0.0
        %1802 = vmatpush1.msra.mxu0 %v867
        %1803 = vmatprep.subr.mxu0 0.0
        %1804 = vmatpush1.msra.mxu0 %v872
        %1805 = vmatprep.subr.mxu0 0.0
        %1806 = vmatpush1.msra.mxu0 0.0
        %1807 = vmatprep.subr.mxu0 0.0
        %1808 = vmatpush1.msra.mxu0 0.0
        %1809 = vmatprep.subr.mxu0 0.0
        %1810 = vmatpush1.msra.mxu0 0.0
        %1811 = vmatprep.subr.mxu0 0.0
        %1812 = vmatpush1.msra.mxu0 0.0
        %1813 = vmatprep.subr.mxu0 0.0
        %1814 = vmatpush1.msra.mxu0 0.0
        %1815 = vmatprep.subr.mxu0 0.0
        %1816 = vmatpush1.msra.mxu0 0.0
        %1817 = vmatprep.subr.mxu0 0.0
        %1818 = vmatpush1.msra.mxu0 0.0
        %1819 = vmatprep.subr.mxu0 0.0
        %1820 = vmatpush1.msra.mxu0 0.0
        %1821 = vmatprep.subr.mxu0 0.0
        %1822 = vmatpush1.msra.mxu0 0.0
        %1823 = vmatprep.subr.mxu0 0.0
        %1824 = vmatpush1.msra.mxu0 0.0
        %1825 = vmatprep.subr.mxu0 0.0
        %1826 = vmatpush1.msra.mxu0 0.0
        %1827 = vmatprep.subr.mxu0 0.0
        %1828 = vmatpush1.msra.mxu0 0.0
        %1829 = vmatprep.subr.mxu0 0.0
        %1830 = vmatpush1.msra.mxu0 0.0
        %1831 = vmatprep.subr.mxu0 0.0
        %1832 = vmatpush1.msra.mxu0 0.0
        %1833 = vmatprep.subr.mxu0 0.0
        %1834 = vmatpush1.msra.mxu0 0.0
        %1835 = vmatprep.subr.mxu0 0.0
        %1836 = vmatpush1.msra.mxu0 0.0
        %1837 = vmatprep.subr.mxu0 0.0
        %1838 = vmatpush1.msra.mxu0 0.0
        %1839 = vmatprep.subr.mxu0 0.0
        %1840 = vmatpush1.msra.mxu0 0.0
        %1841 = vmatprep.subr.mxu0 0.0
        %1842 = vmatpush1.msra.mxu0 0.0
        %1843 = vmatprep.subr.mxu0 0.0
        %1844 = vmatpush1.msra.mxu0 0.0
        %1845 = vmatprep.subr.mxu0 0.0
        %1846 = vmatpush1.msra.mxu0 0.0
        %1847 = vmatprep.subr.mxu0 0.0
        %1848 = vmatpush1.msra.mxu0 0.0
        %1849 = vmatprep.subr.mxu0 0.0
        %1850 = vmatpush1.msra.mxu0 0.0
        %1851 = vmatprep.subr.mxu0 0.0
        %1852 = vmatpush1.msra.mxu0 0.0
        %1853 = vmatprep.subr.mxu0 0.0
        %1854 = vmatpush1.msra.mxu0 0.0
        %1855 = vmatprep.subr.mxu0 0.0
        %1856 = vmatpush1.msra.mxu0 0.0
        %1857 = vmatprep.subr.mxu0 0.0
        %1858 = vmatpush1.msra.mxu0 0.0
        %1859 = vmatprep.subr.mxu0 0.0
        %1860 = vmatpush1.msra.mxu0 0.0
        %1861 = vmatprep.subr.mxu0 0.0
        %1862 = vmatpush1.msra.mxu0 0.0
        %1863 = vmatprep.subr.mxu0 0.0
        %1864 = vmatpush1.msra.mxu0 0.0
        %1865 = vmatprep.mubr.f32.mxu0 0.0
        %1866 = vmatmul.mubr.f32.gmra.mrb[0].mxu0 %v896
        %v1867 = vpop.f32.mrb[0].mxu0
        %v1868 = vadd.f32 0.0, %v1867
        %v1869 = vpop.f32.mrb[0].mxu0
        %1870 = vmatprep.mubr.f32.mxu0 0.0
        %1871 = vmatmul.mubr.f32.gmra.mrb[0].mxu0 %v899
        %v1872 = vpop.f32.mrb[0].mxu0
        %v1873 = vadd.f32 0.0, %v1872
        %v1874 = vpop.f32.mrb[0].mxu0
        %1875 = vdwg.mxu0
        %1876 = vmatprep.subr.mxu0 0.0
        %1877 = vmatpush1.msra.mxu0 %v877
        %1878 = vmatprep.subr.mxu0 0.0
        %1879 = vmatpush1.msra.mxu0 %v882
        %1880 = vmatprep.subr.mxu0 0.0
        %1881 = vmatpush1.msra.mxu0 0.0
        %1882 = vmatprep.subr.mxu0 0.0
        %1883 = vmatpush1.msra.mxu0 0.0
        %1884 = vmatprep.subr.mxu0 0.0
        %1885 = vmatpush1.msra.mxu0 0.0
        %1886 = vmatprep.subr.mxu0 0.0
        %1887 = vmatpush1.msra.mxu0 0.0
        %1888 = vmatprep.subr.mxu0 0.0
        %1889 = vmatpush1.msra.mxu0 0.0
        %1890 = vmatprep.subr.mxu0 0.0
        %1891 = vmatpush1.msra.mxu0 0.0
        %1892 = vmatprep.subr.mxu0 0.0
        %1893 = vmatpush1.msra.mxu0 0.0
        %1894 = vmatprep.subr.mxu0 0.0
        %1895 = vmatpush1.msra.mxu0 0.0
        %1896 = vmatprep.subr.mxu0 0.0
        %1897 = vmatpush1.msra.mxu0 0.0
        %1898 = vmatprep.subr.mxu0 0.0
        %1899 = vmatpush1.msra.mxu0 0.0
        %1900 = vmatprep.subr.mxu0 0.0
        %1901 = vmatpush1.msra.mxu0 0.0
        %1902 = vmatprep.subr.mxu0 0.0
        %1903 = vmatpush1.msra.mxu0 0.0
        %1904 = vmatprep.subr.mxu0 0.0
        %1905 = vmatpush1.msra.mxu0 0.0
        %1906 = vmatprep.subr.mxu0 0.0
        %1907 = vmatpush1.msra.mxu0 0.0
        %1908 = vmatprep.subr.mxu0 0.0
        %1909 = vmatpush1.msra.mxu0 0.0
        %1910 = vmatprep.subr.mxu0 0.0
        %1911 = vmatpush1.msra.mxu0 0.0
        %1912 = vmatprep.subr.mxu0 0.0
        %1913 = vmatpush1.msra.mxu0 0.0
        %1914 = vmatprep.subr.mxu0 0.0
        %1915 = vmatpush1.msra.mxu0 0.0
        %1916 = vmatprep.subr.mxu0 0.0
        %1917 = vmatpush1.msra.mxu0 0.0
        %1918 = vmatprep.subr.mxu0 0.0
        %1919 = vmatpush1.msra.mxu0 0.0
        %1920 = vmatprep.subr.mxu0 0.0
        %1921 = vmatpush1.msra.mxu0 0.0
        %1922 = vmatprep.subr.mxu0 0.0
        %1923 = vmatpush1.msra.mxu0 0.0
        %1924 = vmatprep.subr.mxu0 0.0
        %1925 = vmatpush1.msra.mxu0 0.0
        %1926 = vmatprep.subr.mxu0 0.0
        %1927 = vmatpush1.msra.mxu0 0.0
        %1928 = vmatprep.subr.mxu0 0.0
        %1929 = vmatpush1.msra.mxu0 0.0
        %1930 = vmatprep.subr.mxu0 0.0
        %1931 = vmatpush1.msra.mxu0 0.0
        %1932 = vmatprep.subr.mxu0 0.0
        %1933 = vmatpush1.msra.mxu0 0.0
        %1934 = vmatprep.subr.mxu0 0.0
        %1935 = vmatpush1.msra.mxu0 0.0
        %1936 = vmatprep.subr.mxu0 0.0
        %1937 = vmatpush1.msra.mxu0 0.0
        %1938 = vmatprep.subr.mxu0 0.0
        %1939 = vmatpush1.msra.mxu0 0.0
        %1940 = vmatprep.mubr.f32.mxu0 0.0
        %1941 = vmatmul.mubr.f32.gmra.mrb[0].mxu0 %v896
        %v1942 = vpop.f32.mrb[0].mxu0
        %v1943 = vadd.f32 0.0, %v1942
        %v1944 = vpop.f32.mrb[0].mxu0
        %1945 = vmatprep.mubr.f32.mxu0 0.0
        %1946 = vmatmul.mubr.f32.gmra.mrb[0].mxu0 %v899
        %v1947 = vpop.f32.mrb[0].mxu0
        %v1948 = vadd.f32 0.0, %v1947
        %v1949 = vpop.f32.mrb[0].mxu0
        %1950 = vdwg.mxu0
        %1951 = vmatprep.subr.mxu0 0.0
        %1952 = vmatpush1.msra.mxu0 %v887
        %1953 = vmatprep.subr.mxu0 0.0
        %1954 = vmatpush1.msra.mxu0 %v892
        %1955 = vmatprep.subr.mxu0 0.0
        %1956 = vmatpush1.msra.mxu0 0.0
        %1957 = vmatprep.subr.mxu0 0.0
        %1958 = vmatpush1.msra.mxu0 0.0
        %1959 = vmatprep.subr.mxu0 0.0
        %1960 = vmatpush1.msra.mxu0 0.0
        %1961 = vmatprep.subr.mxu0 0.0
        %1962 = vmatpush1.msra.mxu0 0.0
        %1963 = vmatprep.subr.mxu0 0.0
        %1964 = vmatpush1.msra.mxu0 0.0
        %1965 = vmatprep.subr.mxu0 0.0
        %1966 = vmatpush1.msra.mxu0 0.0
        %1967 = vmatprep.subr.mxu0 0.0
        %1968 = vmatpush1.msra.mxu0 0.0
        %1969 = vmatprep.subr.mxu0 0.0
        %1970 = vmatpush1.msra.mxu0 0.0
        %1971 = vmatprep.subr.mxu0 0.0
        %1972 = vmatpush1.msra.mxu0 0.0
        %1973 = vmatprep.subr.mxu0 0.0
        %1974 = vmatpush1.msra.mxu0 0.0
        %1975 = vmatprep.subr.mxu0 0.0
        %1976 = vmatpush1.msra.mxu0 0.0
        %1977 = vmatprep.subr.mxu0 0.0
        %1978 = vmatpush1.msra.mxu0 0.0
        %1979 = vmatprep.subr.mxu0 0.0
        %1980 = vmatpush1.msra.mxu0 0.0
        %1981 = vmatprep.subr.mxu0 0.0
        %1982 = vmatpush1.msra.mxu0 0.0
        %1983 = vmatprep.subr.mxu0 0.0
        %1984 = vmatpush1.msra.mxu0 0.0
        %1985 = vmatprep.subr.mxu0 0.0
        %1986 = vmatpush1.msra.mxu0 0.0
        %1987 = vmatprep.subr.mxu0 0.0
        %1988 = vmatpush1.msra.mxu0 0.0
        %1989 = vmatprep.subr.mxu0 0.0
        %1990 = vmatpush1.msra.mxu0 0.0
        %1991 = vmatprep.subr.mxu0 0.0
        %1992 = vmatpush1.msra.mxu0 0.0
        %1993 = vmatprep.subr.mxu0 0.0
        %1994 = vmatpush1.msra.mxu0 0.0
        %1995 = vmatprep.subr.mxu0 0.0
        %1996 = vmatpush1.msra.mxu0 0.0
        %1997 = vmatprep.subr.mxu0 0.0
        %1998 = vmatpush1.msra.mxu0 0.0
        %1999 = vmatprep.subr.mxu0 0.0
        %2000 = vmatpush1.msra.mxu0 0.0
        %2001 = vmatprep.subr.mxu0 0.0
        %2002 = vmatpush1.msra.mxu0 0.0
        %2003 = vmatprep.subr.mxu0 0.0
        %2004 = vmatpush1.msra.mxu0 0.0
        %2005 = vmatprep.subr.mxu0 0.0
        %2006 = vmatpush1.msra.mxu0 0.0
        %2007 = vmatprep.subr.mxu0 0.0
        %2008 = vmatpush1.msra.mxu0 0.0
        %2009 = vmatprep.subr.mxu0 0.0
        %2010 = vmatpush1.msra.mxu0 0.0
        %2011 = vmatprep.subr.mxu0 0.0
        %2012 = vmatpush1.msra.mxu0 0.0
        %2013 = vmatprep.subr.mxu0 0.0
        %2014 = vmatpush1.msra.mxu0 0.0
        %2015 = vmatprep.mubr.f32.mxu0 0.0
        %2016 = vmatmul.mubr.f32.gmra.mrb[0].mxu0 %v896
        %v2017 = vpop.f32.mrb[0].mxu0
        %v2018 = vadd.f32 0.0, %v2017
        %v2019 = vpop.f32.mrb[0].mxu0
        %2020 = vmatprep.mubr.f32.mxu0 0.0
        %2021 = vmatmul.mubr.f32.gmra.mrb[0].mxu0 %v899
        %v2022 = vpop.f32.mrb[0].mxu0
        %v2023 = vadd.f32 0.0, %v2022
        %v2024 = vpop.f32.mrb[0].mxu0
        %2025 = vdwg.mxu0
        %v2026 = vmul.f32 %v968, %v968
        %v2027 = vmul.f32 %v973, %v973
        %v2028 = vmul.f32 %v1043, %v1043
        %v2029 = vmul.f32 %v1048, %v1048
        %v2030 = vmul.f32 %v1118, %v1118
        %v2031 = vmul.f32 %v1123, %v1123
        %v2032 = vmul.f32 %v1193, %v1193
        %v2033 = vmul.f32 %v1198, %v1198
        %v2034 = vmul.f32 %v1268, %v1268
        %v2035 = vmul.f32 %v1273, %v1273
        %v2036 = vmul.f32 %v1343, %v1343
        %v2037 = vmul.f32 %v1348, %v1348
        %v2038 = vmul.f32 %v968, %v1193
        %v2039 = vmul.f32 %v973, %v1198
        %v2040 = vmul.f32 %v1043, %v1268
        %v2041 = vmul.f32 %v1048, %v1273
        %v2042 = vmul.f32 %v1118, %v1343
        %v2043 = vmul.f32 %v1123, %v1348
        %v2044 = vsub.f32 %v1418, %v2026
        %v2045 = vsub.f32 %v1423, %v2027
        %v2046 = vsub.f32 %v1493, %v2028
        %v2047 = vsub.f32 %v1498, %v2029
        %v2048 = vsub.f32 %v1568, %v2030
        %v2049 = vsub.f32 %v1573, %v2031
        %v2050 = vsub.f32 %v1643, %v2032
        %v2051 = vsub.f32 %v1648, %v2033
        %v2052 = vsub.f32 %v1718, %v2034
        %v2053 = vsub.f32 %v1723, %v2035
        %v2054 = vsub.f32 %v1793, %v2036
        %v2055 = vsub.f32 %v1798, %v2037
        %v2056 = vsub.f32 %v1868, %v2038
        %v2057 = vsub.f32 %v1873, %v2039
        %v2058 = vsub.f32 %v1943, %v2040
        %v2059 = vsub.f32 %v1948, %v2041
        %v2060 = vsub.f32 %v2018, %v2042
        %v2061 = vsub.f32 %v2023, %v2043
        %v2062 = vmul.f32 %v2038, 2.0
        %v2063 = vmul.f32 %v2039, 2.0
        %v2064 = vmul.f32 %v2040, 2.0
        %v2065 = vmul.f32 %v2041, 2.0
        %v2066 = vmul.f32 %v2042, 2.0
        %v2067 = vmul.f32 %v2043, 2.0
        %v2068 = vadd.f32 %v2062, 0.0001
        %v2069 = vadd.f32 %v2063, 0.0001
        %v2070 = vadd.f32 %v2064, 0.0001
        %v2071 = vadd.f32 %v2065, 0.0001
        %v2072 = vadd.f32 %v2066, 0.0001
        %v2073 = vadd.f32 %v2067, 0.0001
        %v2074 = vmul.f32 %v2056, 2.0
        %v2075 = vmul.f32 %v2057, 2.0
        %v2076 = vmul.f32 %v2058, 2.0
        %v2077 = vmul.f32 %v2059, 2.0
        %v2078 = vmul.f32 %v2060, 2.0
        %v2079 = vmul.f32 %v2061, 2.0
        %v2080 = vadd.f32 %v2074, 0.0009
        %v2081 = vadd.f32 %v2075, 0.0009
        %v2082 = vadd.f32 %v2076, 0.0009
        %v2083 = vadd.f32 %v2077, 0.0009
        %v2084 = vadd.f32 %v2078, 0.0009
        %v2085 = vadd.f32 %v2079, 0.0009
        %v2086 = vmul.f32 %v2068, %v2080
        %v2087 = vmul.f32 %v2069, %v2081
        %v2088 = vmul.f32 %v2070, %v2082
        %v2089 = vmul.f32 %v2071, %v2083
        %v2090 = vmul.f32 %v2072, %v2084
        %v2091 = vmul.f32 %v2073, %v2085
        %v2092 = vadd.f32 %v2026, %v2032
        %v2093 = vadd.f32 %v2027, %v2033
        %v2094 = vadd.f32 %v2028, %v2034
        %v2095 = vadd.f32 %v2029, %v2035
        %v2096 = vadd.f32 %v2030, %v2036
        %v2097 = vadd.f32 %v2031, %v2037
        %v2098 = vadd.f32 %v2092, 0.0001
        %v2099 = vadd.f32 %v2093, 0.0001
        %v2100 = vadd.f32 %v2094, 0.0001
        %v2101 = vadd.f32 %v2095, 0.0001
        %v2102 = vadd.f32 %v2096, 0.0001
        %v2103 = vadd.f32 %v2097, 0.0001
        %v2104 = vadd.f32 %v2044, %v2050
        %v2105 = vadd.f32 %v2045, %v2051
        %v2106 = vadd.f32 %v2046, %v2052
        %v2107 = vadd.f32 %v2047, %v2053
        %v2108 = vadd.f32 %v2048, %v2054
        %v2109 = vadd.f32 %v2049, %v2055
        %v2110 = vadd.f32 %v2104, 0.0009
        %v2111 = vadd.f32 %v2105, 0.0009
        %v2112 = vadd.f32 %v2106, 0.0009
        %v2113 = vadd.f32 %v2107, 0.0009
        %v2114 = vadd.f32 %v2108, 0.0009
        %v2115 = vadd.f32 %v2109, 0.0009
        %v2116 = vmul.f32 %v2098, %v2110
        %v2117 = vmul.f32 %v2099, %v2111
        %v2118 = vmul.f32 %v2100, %v2112
        %v2119 = vmul.f32 %v2101, %v2113
        %v2120 = vmul.f32 %v2102, %v2114
        %v2121 = vmul.f32 %v2103, %v2115
        %v2122 = vrcp.pop %v2116
        %v2123 = vrcp.pop %v2117
        %v2124 = vrcp.pop %v2118
        %v2125 = vrcp.pop %v2119
        %v2126 = vrcp.pop %v2120
        %v2127 = vrcp.pop %v2121
        %v2128 = vmul.f32 %v2086, %v2122
        %v2129 = vmul.f32 %v2087, %v2123
        %v2130 = vmul.f32 %v2088, %v2124
        %v2131 = vmul.f32 %v2089, %v2125
        %v2132 = vmul.f32 %v2090, %v2126
        %v2133 = vmul.f32 %v2091, %v2127
        %v2134 = vsel %vm417, %v2128, 0.0
        %v2135 = vsel %vm417, %v2129, 0.0
        %v2136 = vadd.f32 %v2134, %v2135
        %v2137 = vsel %vm417, %v2130, 0.0
        %v2138 = vadd.f32 %v2136, %v2137
        %v2139 = vsel %vm417, %v2131, 0.0
        %v2140 = vadd.f32 %v2138, %v2139
        %v2141 = vsel %vm417, %v2132, 0.0
        %v2142 = vadd.f32 %v2140, %v2141
        %v2143 = vsel %vm417, %v2133, 0.0
        %v2144 = vadd.f32 %v2142, %v2143
        %2145 = vadd.xlane.f32.xlu0 %v2144
        %v2146 = vpop.xlane.xlu0 %2145
        %v2147 = vrot.slane %v2146, 4
        %v2148 = vadd.f32 %v2146, %v2147
        %v2149 = vrot.slane %v2148, 2
        %v2150 = vadd.f32 %v2148, %v2149
        %v2151 = vrot.slane %v2150, 1
        %v2152 = vadd.f32 %v2150, %v2151
        %s2153 = vtos %v2152
        %v2154 = vrcp.pop 768.0
        %s2155 = vtos %v2154
        %s2156 = smul.f32 %s2153, %s2155
        %s2157 = ssub.f32 1.0, %s2156
        %v2158 = vand.u32 2147483647, %v361
        %v2159 = vand.u32 2147483647, %v362
        %v2160 = vand.u32 2147483647, %v363
        %v2161 = vand.u32 2147483647, %v364
        %v2162 = vsel %vm417, %v2158, 0.0
        %v2163 = vsel %vm417, %v2159, 0.0
        %v2164 = vadd.f32 %v2162, %v2163
        %v2165 = vsel %vm417, %v2160, 0.0
        %v2166 = vadd.f32 %v2164, %v2165
        %v2167 = vsel %vm417, %v2161, 0.0
        %v2168 = vadd.f32 %v2166, %v2167
        %2169 = vadd.xlane.f32.xlu0 %v2168
        %v2170 = vpop.xlane.xlu0 %2169
        %v2171 = vrot.slane %v2170, 4
        %v2172 = vadd.f32 %v2170, %v2171
        %v2173 = vrot.slane %v2172, 2
        %v2174 = vadd.f32 %v2172, %v2173
        %v2175 = vrot.slane %v2174, 1
        %v2176 = vadd.f32 %v2174, %v2175
        %s2177 = vtos %v2176
        %v2178 = vrcp.pop 512.0
        %s2179 = vtos %v2178
        %s2180 = smul.f32 %s2177, %s2179
        %v2181 = vlaneseq
        %v2182 = vshrl.u32 %v2181, 7
        %vm2183 = vcmp.eq.s32.totalorder %v2182, 0
        %v2184 = vstv %s440
        %v2185 = vsel %vm2183, %v2184, 0.0
        %vm2186 = vcmp.eq.s32.totalorder %v2182, 1
        %v2187 = vstv %s571
        %v2188 = vsel %vm2186, %v2187, 0.0
        %v2189 = vadd.f32 %v2185, %v2188
        %vm2190 = vcmp.eq.s32.totalorder %v2182, 2
        %v2191 = vstv %s2157
        %v2192 = vsel %vm2190, %v2191, 0.0
        %v2193 = vadd.f32 %v2189, %v2192
        %vm2194 = vcmp.eq.s32.totalorder %v2182, 3
        %v2195 = vstv %s2180
        %v2196 = vsel %vm2194, %v2195, 0.0
        %v2197 = vadd.f32 %v2193, %v2196
        %2198 = vst [vmem:[%s348] sm:$0xff] %v2197
        %s2199 = sand.u32 %s154, 1
        %s2200 = scalar_lea.sflag [#allocation4], %s2199
        %s2201 = sand.u32 %s154, 1
        %s2202 = smul.addr %s2201, 8
        %s2203 = scalar_lea.vmem [#allocation11], %s2202
        // Predicated region
        $region61: #{tpu_custom_call.1} parent=39 // pred_check
          %p2204 = pneg %p164
        $region62: #{tpu_custom_call.1} parent=39 // pred_check_branch
          %2206 = sbr.rel (%p2204) target = $region64
        $region63: #{tpu_custom_call.1} parent=39 // pred_region
          %s2208 = ssub.s32 128, 128
          %2209 = vsyncadd %s2200, %s2208
          %s2210 = smul.addr %s26, 128
          %s2211 = scalar_lea.hbm %s5, %s2210
          %s2213 = sshll.u32 %s2203, 4
          %s2214 = int_to_ptr.vmem [resolvable:$true] %s2213
          %2216 = dma.vmem_to_hbm [thread:$0]  %s2214, 128, %s2211, %s2200
        $region64: #{tpu_custom_call.1} parent=39 // pred_fallthru
          _
      $region40: #{tpu_custom_call.1} parent=5 // pred_fallthru
        _
      %p2217 = scmp.le.s32.totalorder 2, %s21
      // Predicated region
      $region65: #{tpu_custom_call.1} parent=5 // pred_check
        %p2218 = pneg %p2217
      $region66: #{tpu_custom_call.1} parent=5 // pred_check_branch
        %2220 = sbr.rel (%p2218) target = $region68
      $region67: #{tpu_custom_call.1} parent=5 // pred_region
        %s2221 = ssub.s32 %s21, 2
        // Predicated region
        $region69: #{tpu_custom_call.1} parent=67 // pred_check
          %p2222 = pneg %p170
        $region70: #{tpu_custom_call.1} parent=67 // pred_check_branch
          %2224 = sbr.rel (%p2222) target = $region72
        $region71: #{tpu_custom_call.1} parent=67 // pred_region
          %s2225 = sand.u32 %s155, 1
          %s2226 = scalar_lea.sflag [#allocation4], %s2225
          %s2227 = sand.u32 %s155, 1
          %s2228 = smul.addr %s2227, 8
          %s2229 = scalar_lea.vmem [#allocation11], %s2228
          %2230 = dma.done %s2226, 128
        $region72: #{tpu_custom_call.1} parent=67 // pred_fallthru
          _
      $region68: #{tpu_custom_call.1} parent=5 // pred_fallthru
        _
    $region6: #{tpu_custom_call.1} parent=1 // loop_footer
      %s25 = sadd.s32 1, %s21
    $region7: #{tpu_custom_call.1} parent=1 // loop_footer_branch
      %20 = sbr.rel target = $region3
    $region8: #{tpu_custom_call.1} parent=1 // loop_exit
      _
    %2231 = vsyncpa [#allocation3], 1
    %s2232 = scalar_lea.sflag [#allocation3], 1
    %2233 = vsyncpa %s2232, 1
    %2234 = vsyncpa [#allocation6], 1
    %s2235 = scalar_lea.sflag [#allocation6], 1
    %2236 = vsyncpa %s2235, 1
    %2237 = vsyncpa [#allocation9], 1
    %2238 = vsyncpa [#allocation4], 1
    %s2239 = scalar_lea.sflag [#allocation4], 1
    %2240 = vsyncpa %s2239, 1

</llo_original>
